<compile_context>
chip_gen: v7x
topology: tpu7x:2x2x1
jax: 0.10.0
libtpu: 0.0.40
codegen_flags: <defaults>
</compile_context>

<pallas_src>
import functools

import jax
import jax.numpy as jnp
import numpy as np
from jax import lax
from jax.experimental import pallas as pl
from jax.experimental.pallas import tpu as pltpu


# --------------------------------------------------------------------------- #
# Kernel
# --------------------------------------------------------------------------- #
def _agi_kernel(n_layers, bt, n_seq, d_orig, d_pad, compute_dtype,
                x_ref, qkvw_ref, qkvb_ref,
                iw_ref, ib_ref, f1w_ref, f1b_ref, f2w_ref, f2b_ref,
                o_ref, acc_ref):
    """Grid step (i, l): batch tile i (bt elements, flattened rows = bt*N), layer l."""
    rows = bt * n_seq
    dp = d_pad
    scale = float(d_orig) ** (-0.5)
    layer = pl.program_id(1)

    @pl.when(layer == 0)
    def _():
        acc_ref[...] = jnp.zeros_like(acc_ref)

    x = x_ref[...]                                   # (rows, Dp) f32 residual path
    xc = x.astype(compute_dtype)

    # ---- one interaction layer (weights for layer `l` streamed by BlockSpec) ----
    w = qkvw_ref[0].astype(compute_dtype)            # (Dp, 3Dp)
    qkv = jnp.dot(xc, w, preferred_element_type=jnp.float32)      # (rows, 3Dp) f32
    qkv = qkv + qkvb_ref[0]                                        # (1, 3Dp) f32 bias
    qkv_c = qkv.astype(compute_dtype)                # single cast pass of the slab
    theta = qkv_c[:, :dp].reshape(bt, n_seq, dp)
    phi = qkv_c[:, dp:2 * dp].reshape(bt, n_seq, dp)
    rho = qkv_c[:, 2 * dp:].reshape(bt, n_seq, dp)

    # Affinity: contract theta/phi on D (transposed-RHS dot_general, no vxpose).
    s = jnp.einsum("bnd,bmd->bnm", theta, phi,
                   preferred_element_type=jnp.float32) * scale     # (bt, N, N)
    s = s - jnp.max(s, axis=-1, keepdims=True)
    e = jnp.exp(s)
    aff = e * pl.reciprocal(jnp.sum(e, axis=-1, keepdims=True), approx=True)

    upd = jnp.einsum("bnm,bmd->bnd", aff.astype(compute_dtype), rho,
                     preferred_element_type=jnp.float32)            # (bt, N, Dp)
    acc_ref[...] += upd.reshape(rows, dp)

    # ---- epilogue: interacted_linear + residual + normalize + feed_fc ----
    @pl.when(layer == n_layers - 1)
    def _():
        acc = acc_ref[...] * (1.0 / n_layers)
        inter = jnp.dot(acc.astype(compute_dtype),
                        iw_ref[...].astype(compute_dtype),
                        preferred_element_type=jnp.float32) + ib_ref[...]
        res = x + inter                                             # (rows, Dp)

        # F.normalize(..., dim=1): L2 over the sequence axis per batch element.
        res3 = res.reshape(bt, n_seq, dp)
        res3 = res3 * lax.rsqrt(
            jnp.maximum(jnp.sum(res3 * res3, axis=1, keepdims=True), 1e-24))
        res = res3.reshape(rows, dp)

        # feed_fc = Linear -> Linear -> LeakyReLU(0.01)
        h = jnp.dot(res.astype(compute_dtype), f1w_ref[...].astype(compute_dtype),
                    preferred_element_type=jnp.float32) + f1b_ref[...]
        h = jnp.dot(h.astype(compute_dtype), f2w_ref[...].astype(compute_dtype),
                    preferred_element_type=jnp.float32) + f2b_ref[...]
        h = jnp.where(h >= 0, h, 0.01 * h)

        out = res + h
        out3 = out.reshape(bt, n_seq, dp)
        out3 = out3 * lax.rsqrt(
            jnp.maximum(jnp.sum(out3 * out3, axis=1, keepdims=True), 1e-24))
        o_ref[...] = out3.reshape(rows, dp).astype(o_ref.dtype)


# --------------------------------------------------------------------------- #
# Host-side helpers
# --------------------------------------------------------------------------- #
def _round_up(x, m):
    return (x + m - 1) // m * m


def _vmem_capacity_bytes():
    """Physical per-core VMEM (v5e/v6e 128 MiB, v7x 64 MiB); conservative fallback."""
    try:
        return int(pltpu.get_tpu_info().vmem_capacity_bytes)
    except Exception:
        return 64 << 20


def _choose_batch_tile(B, N, vmem_cap):
    """Batch elements per grid step: big row slabs, bounded by the affinity
    working set, divisor of B, sublane-aligned rows, and >= 2 grid steps
    (so the parallel axis can shard across v7x's two TensorCores)."""
    target_rows = 512 if vmem_cap <= (64 << 20) else 1024
    aff_budget = vmem_cap // 8                       # s / e / aff (bt*N*N f32, ~3 live)
    bt_rows = max(1, target_rows // max(N, 1))
    bt_aff = max(1, aff_budget // max(3 * N * N * 4, 1))
    bt = max(1, min(B, bt_rows, bt_aff))
    if B >= 2:
        bt = min(bt, max(1, B // 2))                 # keep >= 2 parallel grid steps
    while bt > 1 and (B % bt or (bt * N) % 8):
        bt -= 1
    if B % bt or (bt * N) % 8:
        bt = B                                       # full-batch block (exempt from 8-align)
    return bt


def prepare_params(params, *, compute_dtype=jnp.float32):
    """One-time (NOT per forward call) param prep: fuse theta/phi/rho into a single
    (L, Dp, 3Dp) weight, zero-pad D to a lane-dense multiple of 128, cast the MXU
    weights to compute_dtype (bf16 recommended on all generations), biases stay f32."""
    L, D, _ = params["tw"].shape
    Dp = _round_up(max(D, 128), 128)
    pd = Dp - D

    def pad_w(w):   # (..., D, D) -> (..., Dp, Dp)
        return jnp.pad(w, [(0, 0)] * (w.ndim - 2) + [(0, pd), (0, pd)])

    def pad_b(b):   # (..., 1, D) -> (..., 1, Dp)
        return jnp.pad(b, [(0, 0)] * (b.ndim - 1) + [(0, pd)])

    qkvw = jnp.concatenate([pad_w(params["tw"]), pad_w(params["pw"]),
                            pad_w(params["rw"])], axis=-1).astype(compute_dtype)
    qkvb = jnp.concatenate([pad_b(params["tb"]), pad_b(params["pb"]),
                            pad_b(params["rb"])], axis=-1).astype(jnp.float32)
    return {
        "qkvw": qkvw, "qkvb": qkvb,
        "iw": pad_w(params["iw"]).astype(compute_dtype),
        "ib": pad_b(params["ib"]).astype(jnp.float32),
        "f1w": pad_w(params["f1w"]).astype(compute_dtype),
        "f1b": pad_b(params["f1b"]).astype(jnp.float32),
        "f2w": pad_w(params["f2w"]).astype(compute_dtype),
        "f2b": pad_b(params["f2b"]).astype(jnp.float32),
        "n_layers": L, "d_orig": D, "d_pad": Dp, "compute_dtype": compute_dtype,
    }


def agi_forward(x, prepared):
    """x: (B, N, D) float32.  prepared: output of prepare_params."""
    B, N, D = x.shape
    L = prepared["n_layers"]
    Dp = prepared["d_pad"]
    cd = prepared["compute_dtype"]
    assert D == prepared["d_orig"]

    vmem_cap = _vmem_capacity_bytes()
    bt = _choose_batch_tile(B, N, vmem_cap)
    rows = bt * N

    # Flatten + lane-dense pad: (B, N, D) -> (B*N, Dp) row slabs (no-op if D%128==0).
    x2 = x.reshape(B * N, D)
    if Dp != D:
        x2 = jnp.pad(x2, ((0, 0), (0, Dp - D)))

    kernel = functools.partial(_agi_kernel, L, bt, N, D, Dp, cd)

    # Rough VMEM budget: streamed QKV layer weights (double-buffered) + epilogue
    # weights + in/out tiles + accumulator + in-kernel temporaries + headroom.
    w_item = jnp.dtype(cd).itemsize
    weight_bytes = (2 * (Dp * 3 * Dp * w_item + 3 * Dp * 4)
                    + 3 * Dp * Dp * w_item + 3 * Dp * 4)
    tile_bytes = 2 * 2 * rows * Dp * 4
    acc_bytes = rows * Dp * 4
    temp_bytes = (rows * 3 * Dp * (4 + w_item)      # qkv f32 + compute-dtype copy
                  + 3 * bt * N * N * 4              # s / e / aff
                  + 4 * rows * Dp * 4)              # upd / res / h / out
    est = weight_bytes + tile_bytes + acc_bytes + temp_bytes + (4 << 20)
    vmem_limit = int(min(max(est, 32 << 20), int(vmem_cap * 0.8)))

    def build_specs(single_buffer_weights):
        kw = {"pipeline_mode": pl.Buffered(1)} if single_buffer_weights else {}
        full = lambda shape: pl.BlockSpec(shape, lambda i, l: (0,) * len(shape), **kw)
        in_specs = [
            pl.BlockSpec((rows, Dp), lambda i, l: (i, 0)),            # x row slab
            pl.BlockSpec((1, Dp, 3 * Dp), lambda i, l: (l, 0, 0)),    # layer-l QKV W
            pl.BlockSpec((1, 1, 3 * Dp), lambda i, l: (l, 0, 0)),     # layer-l QKV b
            full((Dp, Dp)), full((1, Dp)),                            # interacted W, b
            full((Dp, Dp)), full((1, Dp)),                            # feed_fc[0] W, b
            full((Dp, Dp)), full((1, Dp)),                            # feed_fc[1] W, b
        ]
        out_specs = pl.BlockSpec((rows, Dp), lambda i, l: (i, 0))
        return in_specs, out_specs

    def run(single_buffer_weights):
        in_specs, out_specs = build_specs(single_buffer_weights)
        return pl.pallas_call(
            kernel,
            out_shape=jax.ShapeDtypeStruct((B * N, Dp), x.dtype),
            grid_spec=pltpu.PrefetchScalarGridSpec(
                num_scalar_prefetch=0,
                grid=(B // bt, L),                    # layer (reduction) axis last
                in_specs=in_specs,
                out_specs=out_specs,
                scratch_shapes=[pltpu.VMEM((rows, Dp), jnp.float32)],
            ),
            compiler_params=pltpu.CompilerParams(
                dimension_semantics=("parallel", "arbitrary"),
                vmem_limit_bytes=vmem_limit,
            ),
        )(x2, prepared["qkvw"], prepared["qkvb"], prepared["iw"], prepared["ib"],
          prepared["f1w"], prepared["f1b"], prepared["f2w"], prepared["f2b"])

    try:
        out2 = run(True)       # single-buffer the grid-invariant epilogue weights
    except Exception:
        out2 = run(False)      # fallback if pipeline_mode=pl.Buffered(1) is rejected

    return out2.reshape(B, N, Dp)[:, :, :D]


# --------------------------------------------------------------------------- #
# Params + pure-JAX reference
# --------------------------------------------------------------------------- #
def init_params(key, ebd_dim, n_layers):
    ks = jax.random.split(key, 12)
    s = 0.1
    return {
        "tw": jax.random.normal(ks[0], (n_layers, ebd_dim, ebd_dim), jnp.float32) * s,
        "tb": jax.random.normal(ks[1], (n_layers, 1, ebd_dim), jnp.float32) * s,
        "pw": jax.random.normal(ks[2], (n_layers, ebd_dim, ebd_dim), jnp.float32) * s,
        "pb": jax.random.normal(ks[3], (n_layers, 1, ebd_dim), jnp.float32) * s,
        "rw": jax.random.normal(ks[4], (n_layers, ebd_dim, ebd_dim), jnp.float32) * s,
        "rb": jax.random.normal(ks[5], (n_layers, 1, ebd_dim), jnp.float32) * s,
        "iw": jax.random.normal(ks[6], (ebd_dim, ebd_dim), jnp.float32) * s,
        "ib": jax.random.normal(ks[7], (1, ebd_dim), jnp.float32) * s,
        "f1w": jax.random.normal(ks[8], (ebd_dim, ebd_dim), jnp.float32) * s,
        "f1b": jax.random.normal(ks[9], (1, ebd_dim), jnp.float32) * s,
        "f2w": jax.random.normal(ks[10], (ebd_dim, ebd_dim), jnp.float32) * s,
        "f2b": jax.random.normal(ks[11], (1, ebd_dim), jnp.float32) * s,
    }


def agi_reference(x, p, *, n_layers):
    """Pure-JAX reference replicating the PyTorch forward."""
    B, N, D = x.shape
    acc = jnp.zeros_like(x)
    for i in range(n_layers):
        theta = x @ p["tw"][i] + p["tb"][i]
        phi = x @ p["pw"][i] + p["pb"][i]
        rho = x @ p["rw"][i] + p["rb"][i]
        aff = jax.nn.softmax(jnp.einsum("bnd,bmd->bnm", theta, phi) * D ** -0.5, axis=-1)
        acc = acc + jnp.einsum("bnm,bmd->bnd", aff, rho)
    res = x + (acc / n_layers) @ p["iw"] + p["ib"]
    res = res / jnp.maximum(jnp.sqrt(jnp.sum(res * res, axis=1, keepdims=True)), 1e-12)
    h = (res @ p["f1w"] + p["f1b"]) @ p["f2w"] + p["f2b"]
    h = jnp.where(h >= 0, h, 0.01 * h)
    out = res + h
    out = out / jnp.maximum(jnp.sqrt(jnp.sum(out * out, axis=1, keepdims=True)), 1e-12)
    return out


if __name__ == "__main__":
    B, N, D = 2, 8, 32          # batch, sequence, ebdDim
    n_layers = 2

    key = jax.random.PRNGKey(0)
    kx, kp = jax.random.split(key)
    x = jax.random.normal(kx, (B, N, D), jnp.float32)
    params = init_params(kp, D, n_layers)

    ref = agi_reference(x, params, n_layers=n_layers)

    # f32-MXU path; tolerance relaxed for the EUP approx reciprocal in softmax.
    prep_f32 = prepare_params(params, compute_dtype=jnp.float32)
    out = jax.block_until_ready(agi_forward(x, prep_f32))
    np.testing.assert_allclose(np.asarray(out), np.asarray(ref), atol=1e-2, rtol=1e-2)

    # bf16-MXU fast path (recommended on v5e/v6e/v7x); looser tolerance for bf16.
    prep_bf16 = prepare_params(params, compute_dtype=jnp.bfloat16)
    out_bf16 = jax.block_until_ready(agi_forward(x, prep_bf16))
    np.testing.assert_allclose(np.asarray(out_bf16), np.asarray(ref), atol=5e-2, rtol=5e-2)

    print("KERNEL_OK")
</pallas_src>

<mosaic_0001>
module attributes {stable_mosaic.version = 11 : i64} {
  func.func @_agi_kernel(%arg0: i32, %arg1: i32, %arg2: memref<8x128xf32, #tpu.memory_space<vmem>>, %arg3: memref<1x128x384xf32, #tpu.memory_space<vmem>>, %arg4: memref<1x1x384xf32, #tpu.memory_space<vmem>>, %arg5: memref<128x128xf32, #tpu.memory_space<vmem>>, %arg6: memref<1x128xf32, #tpu.memory_space<vmem>>, %arg7: memref<128x128xf32, #tpu.memory_space<vmem>>, %arg8: memref<1x128xf32, #tpu.memory_space<vmem>>, %arg9: memref<128x128xf32, #tpu.memory_space<vmem>>, %arg10: memref<1x128xf32, #tpu.memory_space<vmem>>, %arg11: memref<8x128xf32, #tpu.memory_space<vmem>>, %arg12: memref<8x128xf32, #tpu.memory_space<vmem>>) attributes {dimension_semantics = [#tpu.dimension_semantics<parallel>, #tpu.dimension_semantics<arbitrary>], iteration_bounds = array<i64: 2, 2>, scalar_prefetch = 0 : i64, scratch_operands = 1 : i64, tpu.core_type = #tpu.core_type<tc>, window_params = [{transform_indices = @transform_0, window_bounds = array<i64: 8, 128>}, {transform_indices = @transform_1, window_bounds = array<i64: 1, 128, 384>}, {transform_indices = @transform_2, window_bounds = array<i64: 1, 1, 384>}, {pipeline_mode = #tpu.pipeline_mode<synchronous>, transform_indices = @transform_3, window_bounds = array<i64: 128, 128>}, {pipeline_mode = #tpu.pipeline_mode<synchronous>, transform_indices = @transform_4, window_bounds = array<i64: 1, 128>}, {pipeline_mode = #tpu.pipeline_mode<synchronous>, transform_indices = @transform_5, window_bounds = array<i64: 128, 128>}, {pipeline_mode = #tpu.pipeline_mode<synchronous>, transform_indices = @transform_6, window_bounds = array<i64: 1, 128>}, {pipeline_mode = #tpu.pipeline_mode<synchronous>, transform_indices = @transform_7, window_bounds = array<i64: 128, 128>}, {pipeline_mode = #tpu.pipeline_mode<synchronous>, transform_indices = @transform_8, window_bounds = array<i64: 1, 128>}, {transform_indices = @transform_9, window_bounds = array<i64: 8, 128>}]} {
    %c0_i32 = arith.constant 0 : i32
    %0 = arith.cmpi eq, %arg1, %c0_i32 : i32
    %1 = arith.extui %0 : i1 to i32
    %c0_i32_0 = arith.constant 0 : i32
    %2 = arith.cmpi ne, %1, %c0_i32_0 : i32
    scf.if %2 {
      %cst_18 = arith.constant 0.000000e+00 : f32
      %38 = vector.broadcast %cst_18 : f32 to vector<8x128xf32>
      %c0_19 = arith.constant 0 : index
      %c0_20 = arith.constant 0 : index
      %39 = vector.load %arg12[%c0_19, %c0_20] : memref<8x128xf32, #tpu.memory_space<vmem>>, vector<8x128xf32>
      tpu.vector_store %arg12[%c0_19, %c0_20], %38 {strides = array<i32>} : memref<8x128xf32, #tpu.memory_space<vmem>>, vector<8x128xf32>,
    } else {
    }
    %c0 = arith.constant 0 : index
    %c0_1 = arith.constant 0 : index
    %3 = vector.load %arg2[%c0, %c0_1] : memref<8x128xf32, #tpu.memory_space<vmem>>, vector<8x128xf32>
    %c0_2 = arith.constant 0 : index
    %c0_3 = arith.constant 0 : index
    %c0_4 = arith.constant 0 : index
    %4 = vector.load %arg3[%c0_2, %c0_3, %c0_4] : memref<1x128x384xf32, #tpu.memory_space<vmem>>, vector<1x128x384xf32>
    %5 = vector.shape_cast %4 : vector<1x128x384xf32> to vector<128x384xf32>
    %cst = arith.constant dense<0.000000e+00> : vector<8x384xf32>
    %6 = tpu.matmul %3, %5, %cst {dimension_numbers = #tpu.dot_dimension_numbers<[1], [0], [0], [1], [0, 0, 1, 1], [], []>} : vector<8x128xf32>, vector<128x384xf32>, vector<8x384xf32> -> vector<8x384xf32>
    %c0_5 = arith.constant 0 : index
    %c0_6 = arith.constant 0 : index
    %c0_7 = arith.constant 0 : index
    %7 = vector.load %arg4[%c0_5, %c0_6, %c0_7] : memref<1x1x384xf32, #tpu.memory_space<vmem>>, vector<1x1x384xf32>
    %8 = vector.shape_cast %7 : vector<1x1x384xf32> to vector<1x384xf32>
    %9 = vector.broadcast %8 : vector<1x384xf32> to vector<8x384xf32>
    %10 = arith.addf %6, %9 : vector<8x384xf32>
    %11 = vector.extract_strided_slice %10 {offsets = [0, 0], sizes = [8, 128], strides = [1, 1]} : vector<8x384xf32> to vector<8x128xf32>
    %12 = vector.shape_cast %11 : vector<8x128xf32> to vector<1x8x128xf32>
    %13 = vector.extract_strided_slice %10 {offsets = [0, 128], sizes = [8, 128], strides = [1, 1]} : vector<8x384xf32> to vector<8x128xf32>
    %14 = vector.shape_cast %13 : vector<8x128xf32> to vector<1x8x128xf32>
    %15 = vector.extract_strided_slice %10 {offsets = [0, 256], sizes = [8, 128], strides = [1, 1]} : vector<8x384xf32> to vector<8x128xf32>
    %16 = vector.shape_cast %15 : vector<8x128xf32> to vector<1x8x128xf32>
    "tpu.trace_start"() <{level = 10 : i32, message = "bnd,bmd->bnm"}> : () -> ()
    %cst_8 = arith.constant dense<0.000000e+00> : vector<1x8x8xf32>
    %17 = tpu.matmul %12, %14, %cst_8 {dimension_numbers = #tpu.dot_dimension_numbers<[2], [2], [1], [1], [0, 0, 0, 1, 1, 1], [0], [0]>} : vector<1x8x128xf32>, vector<1x8x128xf32>, vector<1x8x8xf32> -> vector<1x8x8xf32>
    "tpu.trace_stop"() : () -> ()
    %cst_9 = arith.constant 0.176776692 : f32
    %18 = vector.broadcast %cst_9 : f32 to vector<1x8x8xf32>
    %19 = arith.mulf %17, %18 : vector<1x8x8xf32>
    %cst_10 = arith.constant dense<0xFF800000> : vector<1x8xf32>
    %20 = vector.multi_reduction <maximumf>, %19, %cst_10 [2] : vector<1x8x8xf32> to vector<1x8xf32>
    %21 = vector.shape_cast %20 : vector<1x8xf32> to vector<1x8x1xf32>
    %22 = vector.broadcast %21 : vector<1x8x1xf32> to vector<1x8x8xf32>
    %23 = arith.subf %19, %22 : vector<1x8x8xf32>
    %24 = math.exp %23 : vector<1x8x8xf32>
    %cst_11 = arith.constant dense<0.000000e+00> : vector<1x8xf32>
    %25 = vector.multi_reduction <add>, %24, %cst_11 [2] : vector<1x8x8xf32> to vector<1x8xf32>
    %26 = vector.shape_cast %25 : vector<1x8xf32> to vector<1x8x1xf32>
    %27 = tpu.reciprocal %26 {approx = true} : vector<1x8x1xf32> -> vector<1x8x1xf32>
    %28 = vector.broadcast %27 : vector<1x8x1xf32> to vector<1x8x8xf32>
    %29 = arith.mulf %24, %28 : vector<1x8x8xf32>
    "tpu.trace_start"() <{level = 10 : i32, message = "bnm,bmd->bnd"}> : () -> ()
    %cst_12 = arith.constant dense<0.000000e+00> : vector<1x8x128xf32>
    %30 = tpu.matmul %29, %16, %cst_12 {dimension_numbers = #tpu.dot_dimension_numbers<[2], [1], [1], [2], [0, 0, 0, 1, 1, 2], [0], [0]>} : vector<1x8x8xf32>, vector<1x8x128xf32>, vector<1x8x128xf32> -> vector<1x8x128xf32>
    "tpu.trace_stop"() : () -> ()
    %c0_13 = arith.constant 0 : index
    %c0_14 = arith.constant 0 : index
    %31 = vector.load %arg12[%c0_13, %c0_14] : memref<8x128xf32, #tpu.memory_space<vmem>>, vector<8x128xf32>
    %32 = vector.shape_cast %30 : vector<1x8x128xf32> to vector<8x128xf32>
    %33 = arith.addf %31, %32 : vector<8x128xf32>
    %c0_15 = arith.constant 0 : index
    %c0_16 = arith.constant 0 : index
    %34 = vector.load %arg12[%c0_15, %c0_16] : memref<8x128xf32, #tpu.memory_space<vmem>>, vector<8x128xf32>
    tpu.vector_store %arg12[%c0_15, %c0_16], %33 {strides = array<i32>} : memref<8x128xf32, #tpu.memory_space<vmem>>, vector<8x128xf32>,
    %c1_i32 = arith.constant 1 : i32
    %35 = arith.cmpi eq, %arg1, %c1_i32 : i32
    %36 = arith.extui %35 : i1 to i32
    %c0_i32_17 = arith.constant 0 : i32
    %37 = arith.cmpi ne, %36, %c0_i32_17 : i32
    scf.if %37 {
      %c0_18 = arith.constant 0 : index
      %c0_19 = arith.constant 0 : index
      %38 = vector.load %arg12[%c0_18, %c0_19] : memref<8x128xf32, #tpu.memory_space<vmem>>, vector<8x128xf32>
      %cst_20 = arith.constant 5.000000e-01 : f32
      %39 = vector.broadcast %cst_20 : f32 to vector<8x128xf32>
      %40 = arith.mulf %38, %39 : vector<8x128xf32>
      %c0_21 = arith.constant 0 : index
      %c0_22 = arith.constant 0 : index
      %41 = vector.load %arg5[%c0_21, %c0_22] : memref<128x128xf32, #tpu.memory_space<vmem>>, vector<128x128xf32>
      %cst_23 = arith.constant dense<0.000000e+00> : vector<8x128xf32>
      %42 = tpu.matmul %40, %41, %cst_23 {dimension_numbers = #tpu.dot_dimension_numbers<[1], [0], [0], [1], [0, 0, 1, 1], [], []>} : vector<8x128xf32>, vector<128x128xf32>, vector<8x128xf32> -> vector<8x128xf32>
      %c0_24 = arith.constant 0 : index
      %c0_25 = arith.constant 0 : index
      %43 = vector.load %arg6[%c0_24, %c0_25] : memref<1x128xf32, #tpu.memory_space<vmem>>, vector<1x128xf32>
      %44 = vector.broadcast %43 : vector<1x128xf32> to vector<8x128xf32>
      %45 = arith.addf %42, %44 : vector<8x128xf32>
      %46 = arith.addf %3, %45 : vector<8x128xf32>
      %47 = vector.shape_cast %46 : vector<8x128xf32> to vector<1x8x128xf32>
      %48 = arith.mulf %47, %47 : vector<1x8x128xf32>
      %cst_26 = arith.constant dense<0.000000e+00> : vector<1x128xf32>
      %49 = vector.multi_reduction <add>, %48, %cst_26 [1] : vector<1x8x128xf32> to vector<1x128xf32>
      %50 = vector.shape_cast %49 : vector<1x128xf32> to vector<1x1x128xf32>
      %cst_27 = arith.constant 1.000000e-24 : f32
      %51 = vector.broadcast %cst_27 : f32 to vector<1x1x128xf32>
      %52 = arith.maximumf %50, %51 : vector<1x1x128xf32>
      %53 = math.rsqrt %52 : vector<1x1x128xf32>
      %54 = vector.broadcast %53 : vector<1x1x128xf32> to vector<1x8x128xf32>
      %55 = arith.mulf %47, %54 : vector<1x8x128xf32>
      %56 = vector.shape_cast %55 : vector<1x8x128xf32> to vector<8x128xf32>
      %c0_28 = arith.constant 0 : index
      %c0_29 = arith.constant 0 : index
      %57 = vector.load %arg7[%c0_28, %c0_29] : memref<128x128xf32, #tpu.memory_space<vmem>>, vector<128x128xf32>
      %cst_30 = arith.constant dense<0.000000e+00> : vector<8x128xf32>
      %58 = tpu.matmul %56, %57, %cst_30 {dimension_numbers = #tpu.dot_dimension_numbers<[1], [0], [0], [1], [0, 0, 1, 1], [], []>} : vector<8x128xf32>, vector<128x128xf32>, vector<8x128xf32> -> vector<8x128xf32>
      %c0_31 = arith.constant 0 : index
      %c0_32 = arith.constant 0 : index
      %59 = vector.load %arg8[%c0_31, %c0_32] : memref<1x128xf32, #tpu.memory_space<vmem>>, vector<1x128xf32>
      %60 = vector.broadcast %59 : vector<1x128xf32> to vector<8x128xf32>
      %61 = arith.addf %58, %60 : vector<8x128xf32>
      %c0_33 = arith.constant 0 : index
      %c0_34 = arith.constant 0 : index
      %62 = vector.load %arg9[%c0_33, %c0_34] : memref<128x128xf32, #tpu.memory_space<vmem>>, vector<128x128xf32>
      %cst_35 = arith.constant dense<0.000000e+00> : vector<8x128xf32>
      %63 = tpu.matmul %61, %62, %cst_35 {dimension_numbers = #tpu.dot_dimension_numbers<[1], [0], [0], [1], [0, 0, 1, 1], [], []>} : vector<8x128xf32>, vector<128x128xf32>, vector<8x128xf32> -> vector<8x128xf32>
      %c0_36 = arith.constant 0 : index
      %c0_37 = arith.constant 0 : index
      %64 = vector.load %arg10[%c0_36, %c0_37] : memref<1x128xf32, #tpu.memory_space<vmem>>, vector<1x128xf32>
      %65 = vector.broadcast %64 : vector<1x128xf32> to vector<8x128xf32>
      %66 = arith.addf %63, %65 : vector<8x128xf32>
      %cst_38 = arith.constant 0.000000e+00 : f32
      %67 = vector.broadcast %cst_38 : f32 to vector<8x128xf32>
      %68 = arith.cmpf oge, %66, %67 : vector<8x128xf32>
      %cst_39 = arith.constant 0.00999999977 : f32
      %69 = vector.broadcast %cst_39 : f32 to vector<8x128xf32>
      %70 = arith.mulf %69, %66 : vector<8x128xf32>
      %71 = arith.select %68, %66, %70 : vector<8x128xi1>, vector<8x128xf32>
      %72 = arith.addf %56, %71 : vector<8x128xf32>
      %73 = vector.shape_cast %72 : vector<8x128xf32> to vector<1x8x128xf32>
      %74 = arith.mulf %73, %73 : vector<1x8x128xf32>
      %cst_40 = arith.constant dense<0.000000e+00> : vector<1x128xf32>
      %75 = vector.multi_reduction <add>, %74, %cst_40 [1] : vector<1x8x128xf32> to vector<1x128xf32>
      %76 = vector.shape_cast %75 : vector<1x128xf32> to vector<1x1x128xf32>
      %cst_41 = arith.constant 1.000000e-24 : f32
      %77 = vector.broadcast %cst_41 : f32 to vector<1x1x128xf32>
      %78 = arith.maximumf %76, %77 : vector<1x1x128xf32>
      %79 = math.rsqrt %78 : vector<1x1x128xf32>
      %80 = vector.broadcast %79 : vector<1x1x128xf32> to vector<1x8x128xf32>
      %81 = arith.mulf %73, %80 : vector<1x8x128xf32>
      %82 = vector.shape_cast %81 : vector<1x8x128xf32> to vector<8x128xf32>
      %c0_42 = arith.constant 0 : index
      %c0_43 = arith.constant 0 : index
      %83 = vector.load %arg11[%c0_42, %c0_43] : memref<8x128xf32, #tpu.memory_space<vmem>>, vector<8x128xf32>
      tpu.vector_store %arg11[%c0_42, %c0_43], %82 {strides = array<i32>} : memref<8x128xf32, #tpu.memory_space<vmem>>, vector<8x128xf32>,
    } else {
    }
    return
  }
  func.func @transform_0(%arg0: i32, %arg1: i32) -> (i32, i32) {
    %c0_i32 = arith.constant 0 : i32
    %c0_i32_0 = arith.constant 0 : i32
    return %arg0, %c0_i32 : i32, i32
  }
  func.func @transform_1(%arg0: i32, %arg1: i32) -> (i32, i32, i32) {
    %c0_i32 = arith.constant 0 : i32
    %c0_i32_0 = arith.constant 0 : i32
    %c0_i32_1 = arith.constant 0 : i32
    return %arg1, %c0_i32, %c0_i32_0 : i32, i32, i32
  }
  func.func @transform_2(%arg0: i32, %arg1: i32) -> (i32, i32, i32) {
    %c0_i32 = arith.constant 0 : i32
    %c0_i32_0 = arith.constant 0 : i32
    %c0_i32_1 = arith.constant 0 : i32
    return %arg1, %c0_i32, %c0_i32_0 : i32, i32, i32
  }
  func.func @transform_3(%arg0: i32, %arg1: i32) -> (i32, i32) {
    %c0_i32 = arith.constant 0 : i32
    %c0_i32_0 = arith.constant 0 : i32
    %c0_i32_1 = arith.constant 0 : i32
    return %c0_i32, %c0_i32_0 : i32, i32
  }
  func.func @transform_4(%arg0: i32, %arg1: i32) -> (i32, i32) {
    %c0_i32 = arith.constant 0 : i32
    %c0_i32_0 = arith.constant 0 : i32
    %c0_i32_1 = arith.constant 0 : i32
    return %c0_i32, %c0_i32_0 : i32, i32
  }
  func.func @transform_5(%arg0: i32, %arg1: i32) -> (i32, i32) {
    %c0_i32 = arith.constant 0 : i32
    %c0_i32_0 = arith.constant 0 : i32
    %c0_i32_1 = arith.constant 0 : i32
    return %c0_i32, %c0_i32_0 : i32, i32
  }
  func.func @transform_6(%arg0: i32, %arg1: i32) -> (i32, i32) {
    %c0_i32 = arith.constant 0 : i32
    %c0_i32_0 = arith.constant 0 : i32
    %c0_i32_1 = arith.constant 0 : i32
    return %c0_i32, %c0_i32_0 : i32, i32
  }
  func.func @transform_7(%arg0: i32, %arg1: i32) -> (i32, i32) {
    %c0_i32 = arith.constant 0 : i32
    %c0_i32_0 = arith.constant 0 : i32
    %c0_i32_1 = arith.constant 0 : i32
    return %c0_i32, %c0_i32_0 : i32, i32
  }
  func.func @transform_8(%arg0: i32, %arg1: i32) -> (i32, i32) {
    %c0_i32 = arith.constant 0 : i32
    %c0_i32_0 = arith.constant 0 : i32
    %c0_i32_1 = arith.constant 0 : i32
    return %c0_i32, %c0_i32_0 : i32, i32
  }
  func.func @transform_9(%arg0: i32, %arg1: i32) -> (i32, i32) {
    %c0_i32 = arith.constant 0 : i32
    %c0_i32_0 = arith.constant 0 : i32
    return %arg0, %c0_i32 : i32, i32
  }
}

module attributes {stable_mosaic.version = 11 : i64} {
  func.func @_agi_kernel(%arg0: i32, %arg1: i32, %arg2: memref<8x128xf32, #tpu.memory_space<vmem>>, %arg3: memref<1x128x384xf32, #tpu.memory_space<vmem>>, %arg4: memref<1x1x384xf32, #tpu.memory_space<vmem>>, %arg5: memref<128x128xf32, #tpu.memory_space<vmem>>, %arg6: memref<1x128xf32, #tpu.memory_space<vmem>>, %arg7: memref<128x128xf32, #tpu.memory_space<vmem>>, %arg8: memref<1x128xf32, #tpu.memory_space<vmem>>, %arg9: memref<128x128xf32, #tpu.memory_space<vmem>>, %arg10: memref<1x128xf32, #tpu.memory_space<vmem>>, %arg11: memref<8x128xf32, #tpu.memory_space<vmem>>, %arg12: memref<8x128xf32, #tpu.memory_space<vmem>>) attributes {dimension_semantics = [#tpu.dimension_semantics<parallel>, #tpu.dimension_semantics<arbitrary>], iteration_bounds = array<i64: 2, 2>, scalar_prefetch = 0 : i64, scratch_operands = 1 : i64, tpu.core_type = #tpu.core_type<tc>, window_params = [{transform_indices = @transform_0, window_bounds = array<i64: 8, 128>}, {transform_indices = @transform_1, window_bounds = array<i64: 1, 128, 384>}, {transform_indices = @transform_2, window_bounds = array<i64: 1, 1, 384>}, {pipeline_mode = #tpu.pipeline_mode<synchronous>, transform_indices = @transform_3, window_bounds = array<i64: 128, 128>}, {pipeline_mode = #tpu.pipeline_mode<synchronous>, transform_indices = @transform_4, window_bounds = array<i64: 1, 128>}, {pipeline_mode = #tpu.pipeline_mode<synchronous>, transform_indices = @transform_5, window_bounds = array<i64: 128, 128>}, {pipeline_mode = #tpu.pipeline_mode<synchronous>, transform_indices = @transform_6, window_bounds = array<i64: 1, 128>}, {pipeline_mode = #tpu.pipeline_mode<synchronous>, transform_indices = @transform_7, window_bounds = array<i64: 128, 128>}, {pipeline_mode = #tpu.pipeline_mode<synchronous>, transform_indices = @transform_8, window_bounds = array<i64: 1, 128>}, {transform_indices = @transform_9, window_bounds = array<i64: 8, 128>}]} {
    %c0_i32 = arith.constant 0 : i32
    %0 = arith.cmpi eq, %arg1, %c0_i32 : i32
    %1 = arith.extui %0 : i1 to i32
    %c0_i32_0 = arith.constant 0 : i32
    %2 = arith.cmpi ne, %1, %c0_i32_0 : i32
    scf.if %2 {
      %cst_18 = arith.constant 0.000000e+00 : f32
      %38 = vector.broadcast %cst_18 : f32 to vector<8x128xf32>
      %c0_19 = arith.constant 0 : index
      %c0_20 = arith.constant 0 : index
      %39 = vector.load %arg12[%c0_19, %c0_20] : memref<8x128xf32, #tpu.memory_space<vmem>>, vector<8x128xf32>
      tpu.vector_store %arg12[%c0_19, %c0_20], %38 {strides = array<i32>} : memref<8x128xf32, #tpu.memory_space<vmem>>, vector<8x128xf32>,
    } else {
    }
    %c0 = arith.constant 0 : index
    %c0_1 = arith.constant 0 : index
    %3 = vector.load %arg2[%c0, %c0_1] : memref<8x128xf32, #tpu.memory_space<vmem>>, vector<8x128xf32>
    %c0_2 = arith.constant 0 : index
    %c0_3 = arith.constant 0 : index
    %c0_4 = arith.constant 0 : index
    %4 = vector.load %arg3[%c0_2, %c0_3, %c0_4] : memref<1x128x384xf32, #tpu.memory_space<vmem>>, vector<1x128x384xf32>
    %5 = vector.shape_cast %4 : vector<1x128x384xf32> to vector<128x384xf32>
    %cst = arith.constant dense<0.000000e+00> : vector<8x384xf32>
    %6 = tpu.matmul %3, %5, %cst {dimension_numbers = #tpu.dot_dimension_numbers<[1], [0], [0], [1], [0, 0, 1, 1], [], []>} : vector<8x128xf32>, vector<128x384xf32>, vector<8x384xf32> -> vector<8x384xf32>
    %c0_5 = arith.constant 0 : index
    %c0_6 = arith.constant 0 : index
    %c0_7 = arith.constant 0 : index
    %7 = vector.load %arg4[%c0_5, %c0_6, %c0_7] : memref<1x1x384xf32, #tpu.memory_space<vmem>>, vector<1x1x384xf32>
    %8 = vector.shape_cast %7 : vector<1x1x384xf32> to vector<1x384xf32>
    %9 = vector.broadcast %8 : vector<1x384xf32> to vector<8x384xf32>
    %10 = arith.addf %6, %9 : vector<8x384xf32>
    %11 = vector.extract_strided_slice %10 {offsets = [0, 0], sizes = [8, 128], strides = [1, 1]} : vector<8x384xf32> to vector<8x128xf32>
    %12 = vector.shape_cast %11 : vector<8x128xf32> to vector<1x8x128xf32>
    %13 = vector.extract_strided_slice %10 {offsets = [0, 128], sizes = [8, 128], strides = [1, 1]} : vector<8x384xf32> to vector<8x128xf32>
    %14 = vector.shape_cast %13 : vector<8x128xf32> to vector<1x8x128xf32>
    %15 = vector.extract_strided_slice %10 {offsets = [0, 256], sizes = [8, 128], strides = [1, 1]} : vector<8x384xf32> to vector<8x128xf32>
    %16 = vector.shape_cast %15 : vector<8x128xf32> to vector<1x8x128xf32>
    "tpu.trace_start"() <{level = 10 : i32, message = "bnd,bmd->bnm"}> : () -> ()
    %cst_8 = arith.constant dense<0.000000e+00> : vector<1x8x8xf32>
    %17 = tpu.matmul %12, %14, %cst_8 {dimension_numbers = #tpu.dot_dimension_numbers<[2], [2], [1], [1], [0, 0, 0, 1, 1, 1], [0], [0]>} : vector<1x8x128xf32>, vector<1x8x128xf32>, vector<1x8x8xf32> -> vector<1x8x8xf32>
    "tpu.trace_stop"() : () -> ()
    %cst_9 = arith.constant 0.176776692 : f32
    %18 = vector.broadcast %cst_9 : f32 to vector<1x8x8xf32>
    %19 = arith.mulf %17, %18 : vector<1x8x8xf32>
    %cst_10 = arith.constant dense<0xFF800000> : vector<1x8xf32>
    %20 = vector.multi_reduction <maximumf>, %19, %cst_10 [2] : vector<1x8x8xf32> to vector<1x8xf32>
    %21 = vector.shape_cast %20 : vector<1x8xf32> to vector<1x8x1xf32>
    %22 = vector.broadcast %21 : vector<1x8x1xf32> to vector<1x8x8xf32>
    %23 = arith.subf %19, %22 : vector<1x8x8xf32>
    %24 = math.exp %23 : vector<1x8x8xf32>
    %cst_11 = arith.constant dense<0.000000e+00> : vector<1x8xf32>
    %25 = vector.multi_reduction <add>, %24, %cst_11 [2] : vector<1x8x8xf32> to vector<1x8xf32>
    %26 = vector.shape_cast %25 : vector<1x8xf32> to vector<1x8x1xf32>
    %27 = tpu.reciprocal %26 {approx = true} : vector<1x8x1xf32> -> vector<1x8x1xf32>
    %28 = vector.broadcast %27 : vector<1x8x1xf32> to vector<1x8x8xf32>
    %29 = arith.mulf %24, %28 : vector<1x8x8xf32>
    "tpu.trace_start"() <{level = 10 : i32, message = "bnm,bmd->bnd"}> : () -> ()
    %cst_12 = arith.constant dense<0.000000e+00> : vector<1x8x128xf32>
    %30 = tpu.matmul %29, %16, %cst_12 {dimension_numbers = #tpu.dot_dimension_numbers<[2], [1], [1], [2], [0, 0, 0, 1, 1, 2], [0], [0]>} : vector<1x8x8xf32>, vector<1x8x128xf32>, vector<1x8x128xf32> -> vector<1x8x128xf32>
    "tpu.trace_stop"() : () -> ()
    %c0_13 = arith.constant 0 : index
    %c0_14 = arith.constant 0 : index
    %31 = vector.load %arg12[%c0_13, %c0_14] : memref<8x128xf32, #tpu.memory_space<vmem>>, vector<8x128xf32>
    %32 = vector.shape_cast %30 : vector<1x8x128xf32> to vector<8x128xf32>
    %33 = arith.addf %31, %32 : vector<8x128xf32>
    %c0_15 = arith.constant 0 : index
    %c0_16 = arith.constant 0 : index
    %34 = vector.load %arg12[%c0_15, %c0_16] : memref<8x128xf32, #tpu.memory_space<vmem>>, vector<8x128xf32>
    tpu.vector_store %arg12[%c0_15, %c0_16], %33 {strides = array<i32>} : memref<8x128xf32, #tpu.memory_space<vmem>>, vector<8x128xf32>,
    %c1_i32 = arith.constant 1 : i32
    %35 = arith.cmpi eq, %arg1, %c1_i32 : i32
    %36 = arith.extui %35 : i1 to i32
    %c0_i32_17 = arith.constant 0 : i32
    %37 = arith.cmpi ne, %36, %c0_i32_17 : i32
    scf.if %37 {
      %c0_18 = arith.constant 0 : index
      %c0_19 = arith.constant 0 : index
      %38 = vector.load %arg12[%c0_18, %c0_19] : memref<8x128xf32, #tpu.memory_space<vmem>>, vector<8x128xf32>
      %cst_20 = arith.constant 5.000000e-01 : f32
      %39 = vector.broadcast %cst_20 : f32 to vector<8x128xf32>
      %40 = arith.mulf %38, %39 : vector<8x128xf32>
      %c0_21 = arith.constant 0 : index
      %c0_22 = arith.constant 0 : index
      %41 = vector.load %arg5[%c0_21, %c0_22] : memref<128x128xf32, #tpu.memory_space<vmem>>, vector<128x128xf32>
      %cst_23 = arith.constant dense<0.000000e+00> : vector<8x128xf32>
      %42 = tpu.matmul %40, %41, %cst_23 {dimension_numbers = #tpu.dot_dimension_numbers<[1], [0], [0], [1], [0, 0, 1, 1], [], []>} : vector<8x128xf32>, vector<128x128xf32>, vector<8x128xf32> -> vector<8x128xf32>
      %c0_24 = arith.constant 0 : index
      %c0_25 = arith.constant 0 : index
      %43 = vector.load %arg6[%c0_24, %c0_25] : memref<1x128xf32, #tpu.memory_space<vmem>>, vector<1x128xf32>
      %44 = vector.broadcast %43 : vector<1x128xf32> to vector<8x128xf32>
      %45 = arith.addf %42, %44 : vector<8x128xf32>
      %46 = arith.addf %3, %45 : vector<8x128xf32>
      %47 = vector.shape_cast %46 : vector<8x128xf32> to vector<1x8x128xf32>
      %48 = arith.mulf %47, %47 : vector<1x8x128xf32>
      %cst_26 = arith.constant dense<0.000000e+00> : vector<1x128xf32>
      %49 = vector.multi_reduction <add>, %48, %cst_26 [1] : vector<1x8x128xf32> to vector<1x128xf32>
      %50 = vector.shape_cast %49 : vector<1x128xf32> to vector<1x1x128xf32>
      %cst_27 = arith.constant 1.000000e-24 : f32
      %51 = vector.broadcast %cst_27 : f32 to vector<1x1x128xf32>
      %52 = arith.maximumf %50, %51 : vector<1x1x128xf32>
      %53 = math.rsqrt %52 : vector<1x1x128xf32>
      %54 = vector.broadcast %53 : vector<1x1x128xf32> to vector<1x8x128xf32>
      %55 = arith.mulf %47, %54 : vector<1x8x128xf32>
      %56 = vector.shape_cast %55 : vector<1x8x128xf32> to vector<8x128xf32>
      %c0_28 = arith.constant 0 : index
      %c0_29 = arith.constant 0 : index
      %57 = vector.load %arg7[%c0_28, %c0_29] : memref<128x128xf32, #tpu.memory_space<vmem>>, vector<128x128xf32>
      %cst_30 = arith.constant dense<0.000000e+00> : vector<8x128xf32>
      %58 = tpu.matmul %56, %57, %cst_30 {dimension_numbers = #tpu.dot_dimension_numbers<[1], [0], [0], [1], [0, 0, 1, 1], [], []>} : vector<8x128xf32>, vector<128x128xf32>, vector<8x128xf32> -> vector<8x128xf32>
      %c0_31 = arith.constant 0 : index
      %c0_32 = arith.constant 0 : index
      %59 = vector.load %arg8[%c0_31, %c0_32] : memref<1x128xf32, #tpu.memory_space<vmem>>, vector<1x128xf32>
      %60 = vector.broadcast %59 : vector<1x128xf32> to vector<8x128xf32>
      %61 = arith.addf %58, %60 : vector<8x128xf32>
      %c0_33 = arith.constant 0 : index
      %c0_34 = arith.constant 0 : index
      %62 = vector.load %arg9[%c0_33, %c0_34] : memref<128x128xf32, #tpu.memory_space<vmem>>, vector<128x128xf32>
      %cst_35 = arith.constant dense<0.000000e+00> : vector<8x128xf32>
      %63 = tpu.matmul %61, %62, %cst_35 {dimension_numbers = #tpu.dot_dimension_numbers<[1], [0], [0], [1], [0, 0, 1, 1], [], []>} : vector<8x128xf32>, vector<128x128xf32>, vector<8x128xf32> -> vector<8x128xf32>
      %c0_36 = arith.constant 0 : index
      %c0_37 = arith.constant 0 : index
      %64 = vector.load %arg10[%c0_36, %c0_37] : memref<1x128xf32, #tpu.memory_space<vmem>>, vector<1x128xf32>
      %65 = vector.broadcast %64 : vector<1x128xf32> to vector<8x128xf32>
      %66 = arith.addf %63, %65 : vector<8x128xf32>
      %cst_38 = arith.constant 0.000000e+00 : f32
      %67 = vector.broadcast %cst_38 : f32 to vector<8x128xf32>
      %68 = arith.cmpf oge, %66, %67 : vector<8x128xf32>
      %cst_39 = arith.constant 0.00999999977 : f32
      %69 = vector.broadcast %cst_39 : f32 to vector<8x128xf32>
      %70 = arith.mulf %69, %66 : vector<8x128xf32>
      %71 = arith.select %68, %66, %70 : vector<8x128xi1>, vector<8x128xf32>
      %72 = arith.addf %56, %71 : vector<8x128xf32>
      %73 = vector.shape_cast %72 : vector<8x128xf32> to vector<1x8x128xf32>
      %74 = arith.mulf %73, %73 : vector<1x8x128xf32>
      %cst_40 = arith.constant dense<0.000000e+00> : vector<1x128xf32>
      %75 = vector.multi_reduction <add>, %74, %cst_40 [1] : vector<1x8x128xf32> to vector<1x128xf32>
      %76 = vector.shape_cast %75 : vector<1x128xf32> to vector<1x1x128xf32>
      %cst_41 = arith.constant 1.000000e-24 : f32
      %77 = vector.broadcast %cst_41 : f32 to vector<1x1x128xf32>
      %78 = arith.maximumf %76, %77 : vector<1x1x128xf32>
      %79 = math.rsqrt %78 : vector<1x1x128xf32>
      %80 = vector.broadcast %79 : vector<1x1x128xf32> to vector<1x8x128xf32>
      %81 = arith.mulf %73, %80 : vector<1x8x128xf32>
      %82 = vector.shape_cast %81 : vector<1x8x128xf32> to vector<8x128xf32>
      %c0_42 = arith.constant 0 : index
      %c0_43 = arith.constant 0 : index
      %83 = vector.load %arg11[%c0_42, %c0_43] : memref<8x128xf32, #tpu.memory_space<vmem>>, vector<8x128xf32>
      tpu.vector_store %arg11[%c0_42, %c0_43], %82 {strides = array<i32>} : memref<8x128xf32, #tpu.memory_space<vmem>>, vector<8x128xf32>,
    } else {
    }
    return
  }
  func.func @transform_0(%arg0: i32, %arg1: i32) -> (i32, i32) {
    %c0_i32 = arith.constant 0 : i32
    %c0_i32_0 = arith.constant 0 : i32
    return %arg0, %c0_i32 : i32, i32
  }
  func.func @transform_1(%arg0: i32, %arg1: i32) -> (i32, i32, i32) {
    %c0_i32 = arith.constant 0 : i32
    %c0_i32_0 = arith.constant 0 : i32
    %c0_i32_1 = arith.constant 0 : i32
    return %arg1, %c0_i32, %c0_i32_0 : i32, i32, i32
  }
  func.func @transform_2(%arg0: i32, %arg1: i32) -> (i32, i32, i32) {
    %c0_i32 = arith.constant 0 : i32
    %c0_i32_0 = arith.constant 0 : i32
    %c0_i32_1 = arith.constant 0 : i32
    return %arg1, %c0_i32, %c0_i32_0 : i32, i32, i32
  }
  func.func @transform_3(%arg0: i32, %arg1: i32) -> (i32, i32) {
    %c0_i32 = arith.constant 0 : i32
    %c0_i32_0 = arith.constant 0 : i32
    %c0_i32_1 = arith.constant 0 : i32
    return %c0_i32, %c0_i32_0 : i32, i32
  }
  func.func @transform_4(%arg0: i32, %arg1: i32) -> (i32, i32) {
    %c0_i32 = arith.constant 0 : i32
    %c0_i32_0 = arith.constant 0 : i32
    %c0_i32_1 = arith.constant 0 : i32
    return %c0_i32, %c0_i32_0 : i32, i32
  }
  func.func @transform_5(%arg0: i32, %arg1: i32) -> (i32, i32) {
    %c0_i32 = arith.constant 0 : i32
    %c0_i32_0 = arith.constant 0 : i32
    %c0_i32_1 = arith.constant 0 : i32
    return %c0_i32, %c0_i32_0 : i32, i32
  }
  func.func @transform_6(%arg0: i32, %arg1: i32) -> (i32, i32) {
    %c0_i32 = arith.constant 0 : i32
    %c0_i32_0 = arith.constant 0 : i32
    %c0_i32_1 = arith.constant 0 : i32
    return %c0_i32, %c0_i32_0 : i32, i32
  }
  func.func @transform_7(%arg0: i32, %arg1: i32) -> (i32, i32) {
    %c0_i32 = arith.constant 0 : i32
    %c0_i32_0 = arith.constant 0 : i32
    %c0_i32_1 = arith.constant 0 : i32
    return %c0_i32, %c0_i32_0 : i32, i32
  }
  func.func @transform_8(%arg0: i32, %arg1: i32) -> (i32, i32) {
    %c0_i32 = arith.constant 0 : i32
    %c0_i32_0 = arith.constant 0 : i32
    %c0_i32_1 = arith.constant 0 : i32
    return %c0_i32, %c0_i32_0 : i32, i32
  }
  func.func @transform_9(%arg0: i32, %arg1: i32) -> (i32, i32) {
    %c0_i32 = arith.constant 0 : i32
    %c0_i32_0 = arith.constant 0 : i32
    return %arg0, %c0_i32 : i32, i32
  }
}

</mosaic_0001>

<llo_original>
// kernel: tpu_custom_call.1
$region0: #{tpu_custom_call.1}
  #allocation0 [shape = 'u32[]', space=smem, size = 0x4, offset = 0x4, fixed_abs, tag = 'smem constant byte address 0x4 - core index']
  #allocation1 [shape = 'u32[144,128]{1,0:T(1,128)}', space=vmem, size = 0x12000, scoped, tag = 'internal scratch']
  #allocation2 [shape = 'f32[8,128]{1,0:T(8,128)}', space=vmem, size = 0x1000, scoped, tag = 'scratch operand']
  %s0 = inlined_call_operand.hbm [shape: f32[16,128], index: 0, kind: input, shape index: {}]
  %s1 = inlined_call_operand.hbm [shape: f32[2,128,384], index: 1, kind: input, shape index: {}]
  %s2 = inlined_call_operand.vmem [shape: f32[2,1,384], index: 2, kind: input, shape index: {}]
  %s3 = inlined_call_operand.hbm [shape: f32[128,128], index: 3, kind: input, shape index: {}]
  %s4 = inlined_call_operand.vmem [shape: f32[1,128], index: 4, kind: input, shape index: {}]
  %s5 = inlined_call_operand.hbm [shape: f32[128,128], index: 5, kind: input, shape index: {}]
  %s6 = inlined_call_operand.vmem [shape: f32[1,128], index: 6, kind: input, shape index: {}]
  %s7 = inlined_call_operand.hbm [shape: f32[128,128], index: 7, kind: input, shape index: {}]
  %s8 = inlined_call_operand.vmem [shape: f32[1,128], index: 8, kind: input, shape index: {}]
  %s9 = inlined_call_operand.hbm [shape: f32[16,128], index: 9, kind: output, shape index: {}]
  %s10 = sld [smem:[#allocation0]]
  $region97: #{tpu_custom_call.1} parent=0
    _
  %s12 = ssub.s32 1, %s10
  %s13 = scalar_select 0, %s12, %s10
  $region1: #{tpu_custom_call.1} parent=0
    #allocation3 [shape = 'u8[8192]{0}', space=vmem, size = 0x2000, scoped, tag = 'input window, operand 0']
    #allocation4 [shape = 's32[2]{0}', space=sflag, size = 0x8, scoped, tag = 'scoped memory for tpu_custom_call.1']
    #allocation5 [shape = 's32[2]{0}', space=sflag, size = 0x8, scoped, tag = 'scoped memory for tpu_custom_call.1']
    #allocation6 [shape = 'u8[393216]{0}', space=vmem, size = 0x60000, scoped, tag = 'input window, operand 1']
    #allocation7 [shape = 's32[2]{0}', space=sflag, size = 0x8, scoped, tag = 'scoped memory for tpu_custom_call.1']
    #allocation8 [shape = 'u8[65536]{0}', space=vmem, size = 0x10000, scoped, tag = 'input window, operand 3, single buffered']
    #allocation9 [shape = 'u8[65536]{0}', space=vmem, size = 0x10000, scoped, tag = 'input window, operand 5, single buffered']
    #allocation10 [shape = 's32[1]{0}', space=sflag, size = 0x4, scoped, tag = 'scoped memory for tpu_custom_call.1']
    #allocation11 [shape = 'u8[65536]{0}', space=vmem, size = 0x10000, scoped, tag = 'input window, operand 7, single buffered']
    #allocation12 [shape = 'u8[8192]{0}', space=vmem, size = 0x2000, scoped, tag = 'output window, operand 0']
    %14 = vsyncpa [#allocation4], 0
    %s15 = scalar_lea.sflag [#allocation4], 1
    %16 = vsyncpa %s15, 0
    %17 = vsyncpa [#allocation7], 0
    %s18 = scalar_lea.sflag [#allocation7], 1
    %19 = vsyncpa %s18, 0
    %20 = vsyncpa [#allocation10], 0
    %21 = vsyncpa [#allocation5], 0
    %s22 = scalar_lea.sflag [#allocation5], 1
    %23 = vsyncpa %s22, 0
    loop: start=0, step=1, limit=6
    $region2: #{tpu_custom_call.1} parent=1 // loop_pre_header
      _
    $region3: #{tpu_custom_call.1} parent=1 // loop_header
      %s25 = sphi 0, %s29
      %p26 = scmp.ge.s32.totalorder %s25, 6
      %s32 = sphi 0, %s44
      %s33 = sphi 0, %s40
      %s34 = sphi 0, %s32
      %s35 = sphi 0, %s33
      %s36 = sphi 0, %s34
      %s37 = sphi 0, %s35
      %s47 = sphi 0, %s49
      %s50 = sphi 0, %s47
      %s51 = sphi 0, %s50
      %s67 = sphi 0, %s51
      %s73 = sphi 0, %s75
      %s76 = sphi 0, %s73
      %s77 = sphi 0, %s76
      %s93 = sphi 0, %s77
      %s99 = sphi 0, %s101
      %s102 = sphi 0, %s99
      %s103 = sphi 0, %s102
      %s119 = sphi 0, %s103
      %s123 = sphi 0, %s123
      %s125 = sphi 0, %s123
      %s126 = sphi 0, %s125
      %s140 = sphi 0, %s126
      %s144 = sphi 0, %s144
      %s146 = sphi 0, %s144
      %s147 = sphi 0, %s146
      %s161 = sphi 0, %s147
      %s165 = sphi 0, %s165
      %s167 = sphi 0, %s165
      %s168 = sphi 0, %s167
      %s182 = sphi 0, %s168
      %s186 = sphi 0, %s186
      %s188 = sphi 0, %s186
      %s189 = sphi 0, %s188
      %s203 = sphi 0, %s189
      %s207 = sphi 0, %s207
      %s209 = sphi 0, %s207
      %s210 = sphi 0, %s209
      %s224 = sphi 0, %s210
      %s228 = sphi 0, %s228
      %s230 = sphi 0, %s228
      %s231 = sphi 0, %s230
      %s245 = sphi 0, %s231
      %s251 = sphi 0, %s253
      %s254 = sphi 0, %s251
      %s255 = sphi 0, %s254
      %s271 = sphi 0, %s255
    $region4: #{tpu_custom_call.1} parent=1 // loop_header_branch
      %28 = sbr.rel (%p26) target = $region8
    $region5: #{tpu_custom_call.1} parent=1 // loop_body
      %s30 = ssub.s32 %s25, 1
      %s31 = ssub.s32 %s25, 2
      %s38 = sadd.s32 1, %s33
      %p39 = scmp.ge.s32.totalorder %s38, 2
      %s40 = scalar_select %p39, 0, %s38
      %s41 = sadd.s32 1, %s32
      %s42 = scalar_select %p39, %s41, %s32
      %p43 = scmp.ge.s32.totalorder %s42, 2
      %s44 = scalar_select %p43, 0, %s42
      %s45 = ssub.s32 %s32, %s44
      %p46 = scmp.eq.s32.totalorder %s45, 0
      %s48 = sadd.s32 %s47, 1
      %s49 = scalar_select %p46, %s47, %s48
      %p52 = pneg %p46
      %p53 = scmp.eq.s32.totalorder %s25, 3
      %p54 = por %p52, %p53
      %p55 = scmp.ne.s32.totalorder %s47, %s50
      %p56 = scmp.eq.s32.totalorder %s25, 0
      %p57 = por %p55, %p56
      %p58 = scmp.ne.s32.totalorder %s47, %s50
      %p59 = scmp.eq.s32.totalorder %s30, 3
      %p60 = por %p58, %p59
      %p61 = scmp.ne.s32.totalorder %s50, %s51
      %p62 = scmp.eq.s32.totalorder %s30, 0
      %p63 = por %p61, %p62
      %p64 = scmp.ne.s32.totalorder %s50, %s51
      %p65 = scmp.eq.s32.totalorder %s31, 3
      %p66 = por %p64, %p65
      %p68 = scmp.ne.s32.totalorder %s51, %s67
      %p69 = scmp.eq.s32.totalorder %s31, 0
      %p70 = por %p68, %p69
      %s71 = ssub.s32 %s33, %s40
      %p72 = scmp.eq.s32.totalorder %s71, 0
      %s74 = sadd.s32 %s73, 1
      %s75 = scalar_select %p72, %s73, %s74
      %p78 = pneg %p72
      %p79 = scmp.eq.s32.totalorder %s25, 3
      %p80 = por %p78, %p79
      %p81 = scmp.ne.s32.totalorder %s73, %s76
      %p82 = scmp.eq.s32.totalorder %s25, 0
      %p83 = por %p81, %p82
      %p84 = scmp.ne.s32.totalorder %s73, %s76
      %p85 = scmp.eq.s32.totalorder %s30, 3
      %p86 = por %p84, %p85
      %p87 = scmp.ne.s32.totalorder %s76, %s77
      %p88 = scmp.eq.s32.totalorder %s30, 0
      %p89 = por %p87, %p88
      %p90 = scmp.ne.s32.totalorder %s76, %s77
      %p91 = scmp.eq.s32.totalorder %s31, 3
      %p92 = por %p90, %p91
      %p94 = scmp.ne.s32.totalorder %s77, %s93
      %p95 = scmp.eq.s32.totalorder %s31, 0
      %p96 = por %p94, %p95
      %s97 = ssub.s32 %s33, %s40
      %p98 = scmp.eq.s32.totalorder %s97, 0
      %s100 = sadd.s32 %s99, 1
      %s101 = scalar_select %p98, %s99, %s100
      %p104 = pneg %p98
      %p105 = scmp.eq.s32.totalorder %s25, 3
      %p106 = por %p104, %p105
      %p107 = scmp.ne.s32.totalorder %s99, %s102
      %p108 = scmp.eq.s32.totalorder %s25, 0
      %p109 = por %p107, %p108
      %p110 = scmp.ne.s32.totalorder %s99, %s102
      %p111 = scmp.eq.s32.totalorder %s30, 3
      %p112 = por %p110, %p111
      %p113 = scmp.ne.s32.totalorder %s102, %s103
      %p114 = scmp.eq.s32.totalorder %s30, 0
      %p115 = por %p113, %p114
      %p116 = scmp.ne.s32.totalorder %s102, %s103
      %p117 = scmp.eq.s32.totalorder %s31, 3
      %p118 = por %p116, %p117
      %p120 = scmp.ne.s32.totalorder %s103, %s119
      %p121 = scmp.eq.s32.totalorder %s31, 0
      %p122 = por %p120, %p121
      %s124 = sadd.s32 %s123, 1
      %p127 = scmp.eq.s32.totalorder %s25, 3
      %p128 = scmp.ne.s32.totalorder %s123, %s125
      %p129 = scmp.eq.s32.totalorder %s25, 0
      %p130 = por %p128, %p129
      %p131 = scmp.ne.s32.totalorder %s123, %s125
      %p132 = scmp.eq.s32.totalorder %s30, 3
      %p133 = por %p131, %p132
      %p134 = scmp.ne.s32.totalorder %s125, %s126
      %p135 = scmp.eq.s32.totalorder %s30, 0
      %p136 = por %p134, %p135
      %p137 = scmp.ne.s32.totalorder %s125, %s126
      %p138 = scmp.eq.s32.totalorder %s31, 3
      %p139 = por %p137, %p138
      %p141 = scmp.ne.s32.totalorder %s126, %s140
      %p142 = scmp.eq.s32.totalorder %s31, 0
      %p143 = por %p141, %p142
      %s145 = sadd.s32 %s144, 1
      %p148 = scmp.eq.s32.totalorder %s25, 3
      %p149 = scmp.ne.s32.totalorder %s144, %s146
      %p150 = scmp.eq.s32.totalorder %s25, 0
      %p151 = por %p149, %p150
      %p152 = scmp.ne.s32.totalorder %s144, %s146
      %p153 = scmp.eq.s32.totalorder %s30, 3
      %p154 = por %p152, %p153
      %p155 = scmp.ne.s32.totalorder %s146, %s147
      %p156 = scmp.eq.s32.totalorder %s30, 0
      %p157 = por %p155, %p156
      %p158 = scmp.ne.s32.totalorder %s146, %s147
      %p159 = scmp.eq.s32.totalorder %s31, 3
      %p160 = por %p158, %p159
      %p162 = scmp.ne.s32.totalorder %s147, %s161
      %p163 = scmp.eq.s32.totalorder %s31, 0
      %p164 = por %p162, %p163
      %s166 = sadd.s32 %s165, 1
      %p169 = scmp.eq.s32.totalorder %s25, 3
      %p170 = scmp.ne.s32.totalorder %s165, %s167
      %p171 = scmp.eq.s32.totalorder %s25, 0
      %p172 = por %p170, %p171
      %p173 = scmp.ne.s32.totalorder %s165, %s167
      %p174 = scmp.eq.s32.totalorder %s30, 3
      %p175 = por %p173, %p174
      %p176 = scmp.ne.s32.totalorder %s167, %s168
      %p177 = scmp.eq.s32.totalorder %s30, 0
      %p178 = por %p176, %p177
      %p179 = scmp.ne.s32.totalorder %s167, %s168
      %p180 = scmp.eq.s32.totalorder %s31, 3
      %p181 = por %p179, %p180
      %p183 = scmp.ne.s32.totalorder %s168, %s182
      %p184 = scmp.eq.s32.totalorder %s31, 0
      %p185 = por %p183, %p184
      %s187 = sadd.s32 %s186, 1
      %p190 = scmp.eq.s32.totalorder %s25, 3
      %p191 = scmp.ne.s32.totalorder %s186, %s188
      %p192 = scmp.eq.s32.totalorder %s25, 0
      %p193 = por %p191, %p192
      %p194 = scmp.ne.s32.totalorder %s186, %s188
      %p195 = scmp.eq.s32.totalorder %s30, 3
      %p196 = por %p194, %p195
      %p197 = scmp.ne.s32.totalorder %s188, %s189
      %p198 = scmp.eq.s32.totalorder %s30, 0
      %p199 = por %p197, %p198
      %p200 = scmp.ne.s32.totalorder %s188, %s189
      %p201 = scmp.eq.s32.totalorder %s31, 3
      %p202 = por %p200, %p201
      %p204 = scmp.ne.s32.totalorder %s189, %s203
      %p205 = scmp.eq.s32.totalorder %s31, 0
      %p206 = por %p204, %p205
      %s208 = sadd.s32 %s207, 1
      %p211 = scmp.eq.s32.totalorder %s25, 3
      %p212 = scmp.ne.s32.totalorder %s207, %s209
      %p213 = scmp.eq.s32.totalorder %s25, 0
      %p214 = por %p212, %p213
      %p215 = scmp.ne.s32.totalorder %s207, %s209
      %p216 = scmp.eq.s32.totalorder %s30, 3
      %p217 = por %p215, %p216
      %p218 = scmp.ne.s32.totalorder %s209, %s210
      %p219 = scmp.eq.s32.totalorder %s30, 0
      %p220 = por %p218, %p219
      %p221 = scmp.ne.s32.totalorder %s209, %s210
      %p222 = scmp.eq.s32.totalorder %s31, 3
      %p223 = por %p221, %p222
      %p225 = scmp.ne.s32.totalorder %s210, %s224
      %p226 = scmp.eq.s32.totalorder %s31, 0
      %p227 = por %p225, %p226
      %s229 = sadd.s32 %s228, 1
      %p232 = scmp.eq.s32.totalorder %s25, 3
      %p233 = scmp.ne.s32.totalorder %s228, %s230
      %p234 = scmp.eq.s32.totalorder %s25, 0
      %p235 = por %p233, %p234
      %p236 = scmp.ne.s32.totalorder %s228, %s230
      %p237 = scmp.eq.s32.totalorder %s30, 3
      %p238 = por %p236, %p237
      %p239 = scmp.ne.s32.totalorder %s230, %s231
      %p240 = scmp.eq.s32.totalorder %s30, 0
      %p241 = por %p239, %p240
      %p242 = scmp.ne.s32.totalorder %s230, %s231
      %p243 = scmp.eq.s32.totalorder %s31, 3
      %p244 = por %p242, %p243
      %p246 = scmp.ne.s32.totalorder %s231, %s245
      %p247 = scmp.eq.s32.totalorder %s31, 0
      %p248 = por %p246, %p247
      %s249 = ssub.s32 %s32, %s44
      %p250 = scmp.eq.s32.totalorder %s249, 0
      %s252 = sadd.s32 %s251, 1
      %s253 = scalar_select %p250, %s251, %s252
      %p256 = pneg %p250
      %p257 = scmp.eq.s32.totalorder %s25, 3
      %p258 = por %p256, %p257
      %p259 = scmp.ne.s32.totalorder %s251, %s254
      %p260 = scmp.eq.s32.totalorder %s25, 0
      %p261 = por %p259, %p260
      %p262 = scmp.ne.s32.totalorder %s251, %s254
      %p263 = scmp.eq.s32.totalorder %s30, 3
      %p264 = por %p262, %p263
      %p265 = scmp.ne.s32.totalorder %s254, %s255
      %p266 = scmp.eq.s32.totalorder %s30, 0
      %p267 = por %p265, %p266
      %p268 = scmp.ne.s32.totalorder %s254, %s255
      %p269 = scmp.eq.s32.totalorder %s31, 3
      %p270 = por %p268, %p269
      %p272 = scmp.ne.s32.totalorder %s255, %s271
      %p273 = scmp.eq.s32.totalorder %s31, 0
      %p274 = por %p272, %p273
      %p275 = scmp.le.s32.totalorder 1, %s25
      %p276 = scmp.lt.s32.totalorder %s25, 5
      %p277 = pnand %p275, %p276
      %p278 = pneg %p277
      // Predicated region
      $region9: #{tpu_custom_call.1} parent=5 // pred_check
        _
      $region10: #{tpu_custom_call.1} parent=5 // pred_check_branch
        %280 = sbr.rel (%p277) target = $region12
      $region11: #{tpu_custom_call.1} parent=5 // pred_region
        %s281 = ssub.s32 %s25, 1
        // Predicated region
        $region13: #{tpu_custom_call.1} parent=11 // pred_check
          %p282 = pneg %p136
        $region14: #{tpu_custom_call.1} parent=11 // pred_check_branch
          %284 = sbr.rel (%p282) target = $region16
        $region15: #{tpu_custom_call.1} parent=11 // pred_region
          %s286 = ssub.s32 2048, 2048
          %287 = vsyncadd [#allocation7], %s286
          %s288 = sshll.u32 [#allocation8], 4
          %s289 = int_to_ptr.vmem [resolvable:$true] %s288
          %294 = dma.hbm_to_vmem [thread:$0]  %s3, 2048, %s289, [#allocation7], 128, 128, 8
        $region16: #{tpu_custom_call.1} parent=11 // pred_fallthru
          _
        // Predicated region
        $region17: #{tpu_custom_call.1} parent=11 // pred_check
          %p295 = pneg %p157
        $region18: #{tpu_custom_call.1} parent=11 // pred_check_branch
          %297 = sbr.rel (%p295) target = $region20
        $region19: #{tpu_custom_call.1} parent=11 // pred_region
          _
        $region20: #{tpu_custom_call.1} parent=11 // pred_fallthru
          _
        // Predicated region
        $region21: #{tpu_custom_call.1} parent=11 // pred_check
          %p298 = pneg %p178
        $region22: #{tpu_custom_call.1} parent=11 // pred_check_branch
          %300 = sbr.rel (%p298) target = $region24
        $region23: #{tpu_custom_call.1} parent=11 // pred_region
          %s302 = ssub.s32 2048, 2048
          %303 = vsyncadd [#allocation10], %s302
          %s304 = sshll.u32 [#allocation9], 4
          %s305 = int_to_ptr.vmem [resolvable:$true] %s304
          %310 = dma.hbm_to_vmem [thread:$0]  %s5, 2048, %s305, [#allocation10], 128, 128, 8
        $region24: #{tpu_custom_call.1} parent=11 // pred_fallthru
          _
        // Predicated region
        $region25: #{tpu_custom_call.1} parent=11 // pred_check
          %p311 = pneg %p199
        $region26: #{tpu_custom_call.1} parent=11 // pred_check_branch
          %313 = sbr.rel (%p311) target = $region28
        $region27: #{tpu_custom_call.1} parent=11 // pred_region
          _
        $region28: #{tpu_custom_call.1} parent=11 // pred_fallthru
          _
        // Predicated region
        $region29: #{tpu_custom_call.1} parent=11 // pred_check
          %p314 = pneg %p220
        $region30: #{tpu_custom_call.1} parent=11 // pred_check_branch
          %316 = sbr.rel (%p314) target = $region32
        $region31: #{tpu_custom_call.1} parent=11 // pred_region
          %s318 = ssub.s32 2048, 2048
          %319 = vsyncadd [#allocation10], %s318
          %s320 = sshll.u32 [#allocation11], 4
          %s321 = int_to_ptr.vmem [resolvable:$true] %s320
          %326 = dma.hbm_to_vmem [thread:$0]  %s7, 2048, %s321, [#allocation10], 128, 128, 8
        $region32: #{tpu_custom_call.1} parent=11 // pred_fallthru
          _
        // Predicated region
        $region33: #{tpu_custom_call.1} parent=11 // pred_check
          %p327 = pneg %p241
        $region34: #{tpu_custom_call.1} parent=11 // pred_check_branch
          %329 = sbr.rel (%p327) target = $region36
        $region35: #{tpu_custom_call.1} parent=11 // pred_region
          _
        $region36: #{tpu_custom_call.1} parent=11 // pred_fallthru
          _
      $region12: #{tpu_custom_call.1} parent=5 // pred_fallthru
        _
      %p330 = scmp.lt.s32.totalorder %s25, 4
      // Predicated region
      $region37: #{tpu_custom_call.1} parent=5 // pred_check
        %p331 = pneg %p330
      $region38: #{tpu_custom_call.1} parent=5 // pred_check_branch
        %333 = sbr.rel (%p331) target = $region40
      $region39: #{tpu_custom_call.1} parent=5 // pred_region
        // Predicated region
        $region41: #{tpu_custom_call.1} parent=39 // pred_check
          %p334 = pneg %p57
        $region42: #{tpu_custom_call.1} parent=39 // pred_check_branch
          %336 = sbr.rel (%p334) target = $region44
        $region43: #{tpu_custom_call.1} parent=39 // pred_region
          %s337 = sand.u32 %s47, 1
          %s338 = scalar_lea.sflag [#allocation4], %s337
          %s339 = sand.u32 %s47, 1
          %s340 = smul.addr %s339, 8
          %s341 = scalar_lea.vmem [#allocation3], %s340
          %s343 = ssub.s32 128, 128
          %344 = vsyncadd %s338, %s343
          %s345 = smul.addr %s32, 128
          %s346 = scalar_lea.hbm %s0, %s345
          %s348 = sshll.u32 %s341, 4
          %s349 = int_to_ptr.vmem [resolvable:$true] %s348
          %351 = dma.hbm_to_vmem [thread:$0]  %s346, 128, %s349, %s338
        $region44: #{tpu_custom_call.1} parent=39 // pred_fallthru
          _
        // Predicated region
        $region45: #{tpu_custom_call.1} parent=39 // pred_check
          %p352 = pneg %p83
        $region46: #{tpu_custom_call.1} parent=39 // pred_check_branch
          %354 = sbr.rel (%p352) target = $region48
        $region47: #{tpu_custom_call.1} parent=39 // pred_region
          %s355 = sand.u32 %s25, 1
          %s356 = scalar_lea.sflag [#allocation7], %s355
          %s357 = sand.u32 %s73, 1
          %s358 = smul.addr %s357, 384
          %s359 = scalar_lea.vmem [#allocation6], %s358
          %s361 = ssub.s32 6144, 6144
          %362 = vsyncadd %s356, %s361
          %s363 = smul.addr %s33, 48
          %s364 = smul.addr %s363, 128
          %s365 = scalar_lea.hbm %s1, %s364
          %s366 = sshll.u32 %s359, 4
          %s367 = int_to_ptr.vmem [resolvable:$true] %s366
          %372 = dma.hbm_to_vmem [thread:$0]  %s365, 6144, %s367, %s356, 384, 384, 24
        $region48: #{tpu_custom_call.1} parent=39 // pred_fallthru
          _
        // Predicated region
        $region49: #{tpu_custom_call.1} parent=39 // pred_check
          %p373 = pneg %p109
        $region50: #{tpu_custom_call.1} parent=39 // pred_check_branch
          %375 = sbr.rel (%p373) target = $region52
        $region51: #{tpu_custom_call.1} parent=39 // pred_region
          %p376 = scmp.lt.s32.totalorder %s33, 1
          %s377 = scalar_select %p376, %s33, 1
          %s378 = smul.addr %s377, 3
          %s379 = scalar_lea.vmem %s2, %s378
        $region52: #{tpu_custom_call.1} parent=39 // pred_fallthru
          _
      $region40: #{tpu_custom_call.1} parent=5 // pred_fallthru
        _
      %p380 = scmp.le.s32.totalorder 1, %s25
      %p381 = scmp.lt.s32.totalorder %s25, 5
      %p382 = pnand %p380, %p381
      %p383 = pneg %p382
      // Predicated region
      $region53: #{tpu_custom_call.1} parent=5 // pred_check
        _
      $region54: #{tpu_custom_call.1} parent=5 // pred_check_branch
        %385 = sbr.rel (%p382) target = $region56
      $region55: #{tpu_custom_call.1} parent=5 // pred_region
        %s386 = ssub.s32 %s25, 1
        %s387 = sand.u32 %s50, 1
        %s388 = scalar_lea.sflag [#allocation4], %s387
        %s389 = sand.u32 %s50, 1
        %s390 = smul.addr %s389, 8
        %s391 = scalar_lea.vmem [#allocation3], %s390
        // Predicated region
        $region57: #{tpu_custom_call.1} parent=55 // pred_check
          %p392 = pneg %p63
        $region58: #{tpu_custom_call.1} parent=55 // pred_check_branch
          %394 = sbr.rel (%p392) target = $region60
        $region59: #{tpu_custom_call.1} parent=55 // pred_region
          %395 = dma.done %s388, 128
        $region60: #{tpu_custom_call.1} parent=55 // pred_fallthru
          _
        %s396 = sand.u32 %s30, 1
        %s397 = scalar_lea.sflag [#allocation7], %s396
        %s398 = sand.u32 %s76, 1
        %s399 = smul.addr %s398, 384
        %s400 = scalar_lea.vmem [#allocation6], %s399
        // Predicated region
        $region61: #{tpu_custom_call.1} parent=55 // pred_check
          %p401 = pneg %p89
        $region62: #{tpu_custom_call.1} parent=55 // pred_check_branch
          %403 = sbr.rel (%p401) target = $region64
        $region63: #{tpu_custom_call.1} parent=55 // pred_region
          %404 = dma.done %s397, 6144
        $region64: #{tpu_custom_call.1} parent=55 // pred_fallthru
          _
        // Predicated region
        $region65: #{tpu_custom_call.1} parent=55 // pred_check
          %p405 = pneg %p136
        $region66: #{tpu_custom_call.1} parent=55 // pred_check_branch
          %407 = sbr.rel (%p405) target = $region68
        $region67: #{tpu_custom_call.1} parent=55 // pred_region
          %408 = dma.done [#allocation7], 2048
        $region68: #{tpu_custom_call.1} parent=55 // pred_fallthru
          _
        // Predicated region
        $region69: #{tpu_custom_call.1} parent=55 // pred_check
          %p409 = pneg %p178
        $region70: #{tpu_custom_call.1} parent=55 // pred_check_branch
          %411 = sbr.rel (%p409) target = $region72
        $region71: #{tpu_custom_call.1} parent=55 // pred_region
          %412 = dma.done [#allocation10], 2048
        $region72: #{tpu_custom_call.1} parent=55 // pred_fallthru
          _
        // Predicated region
        $region73: #{tpu_custom_call.1} parent=55 // pred_check
          %p413 = pneg %p220
        $region74: #{tpu_custom_call.1} parent=55 // pred_check_branch
          %415 = sbr.rel (%p413) target = $region76
        $region75: #{tpu_custom_call.1} parent=55 // pred_region
          %416 = dma.done [#allocation10], 2048
        $region76: #{tpu_custom_call.1} parent=55 // pred_fallthru
          _
        %s417 = sand.u32 %s50, 1
        %s418 = scalar_lea.sflag [#allocation4], %s417
        %s419 = sand.u32 %s50, 1
        %s420 = smul.addr %s419, 8
        %s421 = scalar_lea.vmem [#allocation3], %s420
        %p422 = pneg %p63
        %p423 = pneg %p60
        %s424 = sand.u32 %s30, 1
        %s425 = scalar_lea.sflag [#allocation7], %s424
        %s426 = sand.u32 %s76, 1
        %s427 = smul.addr %s426, 384
        %s428 = scalar_lea.vmem [#allocation6], %s427
        %p429 = pneg %p89
        %p430 = pneg %p86
        %p431 = scmp.lt.s32.totalorder %s35, 1
        %s432 = scalar_select %p431, %s35, 1
        %s433 = smul.addr %s432, 3
        %s434 = scalar_lea.vmem %s2, %s433
        %p435 = pneg %p115
        %p436 = pneg %p112
        %p437 = pneg %p136
        %p438 = pneg %p133
        %p439 = pneg %p157
        %p440 = pneg %p154
        %p441 = pneg %p178
        %p442 = pneg %p175
        %p443 = pneg %p199
        %p444 = pneg %p196
        %p445 = pneg %p220
        %p446 = pneg %p217
        %p447 = pneg %p241
        %p448 = pneg %p238
        %p449 = pneg %p267
        %p450 = pneg %p264
        %s451 = sand.u32 %s254, 1
        %s452 = scalar_lea.sflag [#allocation5], %s451
        %s453 = sand.u32 %s254, 1
        %s454 = smul.addr %s453, 8
        %s455 = scalar_lea.vmem [#allocation12], %s454
        %p456 = scmp.lt.s32.totalorder %s35, 1
        %s457 = scalar_select %p456, %s35, 1
        %s458 = smul.addr %s457, 3
        %s459 = scalar_lea.vmem %s2, %s458
        %p460 = scmp.eq.s32.totalorder %s35, 0
        // Predicated region
        $region77: #{tpu_custom_call.1} parent=55 // pred_check
          %p461 = pneg %p460
        $region78: #{tpu_custom_call.1} parent=55 // pred_check_branch
          %463 = sbr.rel (%p461) target = $region80
        $region79: #{tpu_custom_call.1} parent=55 // pred_region
          %464 = vst [vmem:[#allocation2] sm:$0xff] 0.0
        $region80: #{tpu_custom_call.1} parent=55 // pred_fallthru
          _
        %v465 = vld [vmem:[%s391] sm:$0xff]
        %v466 = vld [vmem:[%s400] sm:$0xff]
        %v467 = vld [vmem:[%s400 + $0x8] sm:$0xff]
        %v468 = vld [vmem:[%s400 + $0x10] sm:$0xff]
        %v469 = vld [vmem:[%s400 + $0x18] sm:$0xff]
        %v470 = vld [vmem:[%s400 + $0x20] sm:$0xff]
        %v471 = vld [vmem:[%s400 + $0x28] sm:$0xff]
        %v472 = vld [vmem:[%s400 + $0x30] sm:$0xff]
        %v473 = vld [vmem:[%s400 + $0x38] sm:$0xff]
        %v474 = vld [vmem:[%s400 + $0x40] sm:$0xff]
        %v475 = vld [vmem:[%s400 + $0x48] sm:$0xff]
        %v476 = vld [vmem:[%s400 + $0x50] sm:$0xff]
        %v477 = vld [vmem:[%s400 + $0x58] sm:$0xff]
        %v478 = vld [vmem:[%s400 + $0x60] sm:$0xff]
        %v479 = vld [vmem:[%s400 + $0x68] sm:$0xff]
        %v480 = vld [vmem:[%s400 + $0x70] sm:$0xff]
        %v481 = vld [vmem:[%s400 + $0x78] sm:$0xff]
        %v482 = vld [vmem:[%s400 + $0x80] sm:$0xff]
        %v483 = vld [vmem:[%s400 + $0x88] sm:$0xff]
        %v484 = vld [vmem:[%s400 + $0x90] sm:$0xff]
        %v485 = vld [vmem:[%s400 + $0x98] sm:$0xff]
        %v486 = vld [vmem:[%s400 + $0xa0] sm:$0xff]
        %v487 = vld [vmem:[%s400 + $0xa8] sm:$0xff]
        %v488 = vld [vmem:[%s400 + $0xb0] sm:$0xff]
        %v489 = vld [vmem:[%s400 + $0xb8] sm:$0xff]
        %v490 = vld [vmem:[%s400 + $0xc0] sm:$0xff]
        %v491 = vld [vmem:[%s400 + $0xc8] sm:$0xff]
        %v492 = vld [vmem:[%s400 + $0xd0] sm:$0xff]
        %v493 = vld [vmem:[%s400 + $0xd8] sm:$0xff]
        %v494 = vld [vmem:[%s400 + $0xe0] sm:$0xff]
        %v495 = vld [vmem:[%s400 + $0xe8] sm:$0xff]
        %v496 = vld [vmem:[%s400 + $0xf0] sm:$0xff]
        %v497 = vld [vmem:[%s400 + $0xf8] sm:$0xff]
        %v498 = vld [vmem:[%s400 + $0x100] sm:$0xff]
        %v499 = vld [vmem:[%s400 + $0x108] sm:$0xff]
        %v500 = vld [vmem:[%s400 + $0x110] sm:$0xff]
        %v501 = vld [vmem:[%s400 + $0x118] sm:$0xff]
        %v502 = vld [vmem:[%s400 + $0x120] sm:$0xff]
        %v503 = vld [vmem:[%s400 + $0x128] sm:$0xff]
        %v504 = vld [vmem:[%s400 + $0x130] sm:$0xff]
        %v505 = vld [vmem:[%s400 + $0x138] sm:$0xff]
        %v506 = vld [vmem:[%s400 + $0x140] sm:$0xff]
        %v507 = vld [vmem:[%s400 + $0x148] sm:$0xff]
        %v508 = vld [vmem:[%s400 + $0x150] sm:$0xff]
        %v509 = vld [vmem:[%s400 + $0x158] sm:$0xff]
        %v510 = vld [vmem:[%s400 + $0x160] sm:$0xff]
        %v511 = vld [vmem:[%s400 + $0x168] sm:$0xff]
        %v512 = vld [vmem:[%s400 + $0x170] sm:$0xff]
        %v513 = vld [vmem:[%s400 + $0x178] sm:$0xff]
        %v514 = vld [vmem:[%s459] sm:$0x7]
        %v516 = vlaneseq
        %v517 = vshrl.u32 %v516, 7
        %v518 = vsub.s32 0, %v517
        %v519 = vrot.slane %v514, %v518
        %v520 = vlaneseq
        %v521 = vshrl.u32 %v520, 7
        %v522 = vsub.s32 1, %v521
        %v523 = vrot.slane %v514, %v522
        %v524 = vlaneseq
        %v525 = vshrl.u32 %v524, 7
        %v526 = vsub.s32 2, %v525
        %v527 = vrot.slane %v514, %v526
        %531 = vmatprep.subr.mxu0 %v467
        %532 = vmatpush1.msra.mxu0 %v466
        %533 = vmatprep.subr.mxu0 %v470
        %534 = vmatpush1.msra.mxu0 %v469
        %535 = vmatprep.subr.mxu0 %v473
        %536 = vmatpush1.msra.mxu0 %v472
        %537 = vmatprep.subr.mxu0 %v476
        %538 = vmatpush1.msra.mxu0 %v475
        %539 = vmatprep.subr.mxu0 %v479
        %540 = vmatpush1.msra.mxu0 %v478
        %541 = vmatprep.subr.mxu0 %v482
        %542 = vmatpush1.msra.mxu0 %v481
        %543 = vmatprep.subr.mxu0 %v485
        %544 = vmatpush1.msra.mxu0 %v484
        %545 = vmatprep.subr.mxu0 %v488
        %546 = vmatpush1.msra.mxu0 %v487
        %547 = vmatprep.subr.mxu0 %v491
        %548 = vmatpush1.msra.mxu0 %v490
        %549 = vmatprep.subr.mxu0 %v494
        %550 = vmatpush1.msra.mxu0 %v493
        %551 = vmatprep.subr.mxu0 %v497
        %552 = vmatpush1.msra.mxu0 %v496
        %553 = vmatprep.subr.mxu0 %v500
        %554 = vmatpush1.msra.mxu0 %v499
        %555 = vmatprep.subr.mxu0 %v503
        %556 = vmatpush1.msra.mxu0 %v502
        %557 = vmatprep.subr.mxu0 %v506
        %558 = vmatpush1.msra.mxu0 %v505
        %559 = vmatprep.subr.mxu0 %v509
        %560 = vmatpush1.msra.mxu0 %v508
        %561 = vmatprep.subr.mxu0 %v512
        %562 = vmatpush1.msra.mxu0 %v511
        %563 = vmatprep.subr.mxu0 0.0
        %564 = vmatpush1.msra.mxu0 0.0
        %565 = vmatprep.subr.mxu0 0.0
        %566 = vmatpush1.msra.mxu0 0.0
        %567 = vmatprep.subr.mxu0 0.0
        %568 = vmatpush1.msra.mxu0 0.0
        %569 = vmatprep.subr.mxu0 0.0
        %570 = vmatpush1.msra.mxu0 0.0
        %571 = vmatprep.subr.mxu0 0.0
        %572 = vmatpush1.msra.mxu0 0.0
        %573 = vmatprep.subr.mxu0 0.0
        %574 = vmatpush1.msra.mxu0 0.0
        %575 = vmatprep.subr.mxu0 0.0
        %576 = vmatpush1.msra.mxu0 0.0
        %577 = vmatprep.subr.mxu0 0.0
        %578 = vmatpush1.msra.mxu0 0.0
        %579 = vmatprep.subr.mxu0 0.0
        %580 = vmatpush1.msra.mxu0 0.0
        %581 = vmatprep.subr.mxu0 0.0
        %582 = vmatpush1.msra.mxu0 0.0
        %583 = vmatprep.subr.mxu0 0.0
        %584 = vmatpush1.msra.mxu0 0.0
        %585 = vmatprep.subr.mxu0 0.0
        %586 = vmatpush1.msra.mxu0 0.0
        %587 = vmatprep.subr.mxu0 0.0
        %588 = vmatpush1.msra.mxu0 0.0
        %589 = vmatprep.subr.mxu0 0.0
        %590 = vmatpush1.msra.mxu0 0.0
        %591 = vmatprep.subr.mxu0 0.0
        %592 = vmatpush1.msra.mxu0 0.0
        %593 = vmatprep.subr.mxu0 0.0
        %594 = vmatpush1.msra.mxu0 0.0
        %595 = vmatprep.mubr.f32.mxu0 0.0
        %596 = vmatmul.mubr.f32.gmra.mrb[0].mxu0 %v465
        %v597 = vpop.f32.mrb[0].mxu0
        %v598 = vadd.f32 %v519, %v597
        %v599 = vpop.f32.mrb[0].mxu0
        %v600 = vadd.f32 %v523, %v599
        %601 = vdwg.mxu0
        %602 = vmatprep.subr.mxu0 0.0
        %603 = vmatpush1.msra.mxu0 %v468
        %604 = vmatprep.subr.mxu0 0.0
        %605 = vmatpush1.msra.mxu0 %v471
        %606 = vmatprep.subr.mxu0 0.0
        %607 = vmatpush1.msra.mxu0 %v474
        %608 = vmatprep.subr.mxu0 0.0
        %609 = vmatpush1.msra.mxu0 %v477
        %610 = vmatprep.subr.mxu0 0.0
        %611 = vmatpush1.msra.mxu0 %v480
        %612 = vmatprep.subr.mxu0 0.0
        %613 = vmatpush1.msra.mxu0 %v483
        %614 = vmatprep.subr.mxu0 0.0
        %615 = vmatpush1.msra.mxu0 %v486
        %616 = vmatprep.subr.mxu0 0.0
        %617 = vmatpush1.msra.mxu0 %v489
        %618 = vmatprep.subr.mxu0 0.0
        %619 = vmatpush1.msra.mxu0 %v492
        %620 = vmatprep.subr.mxu0 0.0
        %621 = vmatpush1.msra.mxu0 %v495
        %622 = vmatprep.subr.mxu0 0.0
        %623 = vmatpush1.msra.mxu0 %v498
        %624 = vmatprep.subr.mxu0 0.0
        %625 = vmatpush1.msra.mxu0 %v501
        %626 = vmatprep.subr.mxu0 0.0
        %627 = vmatpush1.msra.mxu0 %v504
        %628 = vmatprep.subr.mxu0 0.0
        %629 = vmatpush1.msra.mxu0 %v507
        %630 = vmatprep.subr.mxu0 0.0
        %631 = vmatpush1.msra.mxu0 %v510
        %632 = vmatprep.subr.mxu0 0.0
        %633 = vmatpush1.msra.mxu0 %v513
        %634 = vmatprep.subr.mxu0 0.0
        %635 = vmatpush1.msra.mxu0 0.0
        %636 = vmatprep.subr.mxu0 0.0
        %637 = vmatpush1.msra.mxu0 0.0
        %638 = vmatprep.subr.mxu0 0.0
        %639 = vmatpush1.msra.mxu0 0.0
        %640 = vmatprep.subr.mxu0 0.0
        %641 = vmatpush1.msra.mxu0 0.0
        %642 = vmatprep.subr.mxu0 0.0
        %643 = vmatpush1.msra.mxu0 0.0
        %644 = vmatprep.subr.mxu0 0.0
        %645 = vmatpush1.msra.mxu0 0.0
        %646 = vmatprep.subr.mxu0 0.0
        %647 = vmatpush1.msra.mxu0 0.0
        %648 = vmatprep.subr.mxu0 0.0
        %649 = vmatpush1.msra.mxu0 0.0
        %650 = vmatprep.subr.mxu0 0.0
        %651 = vmatpush1.msra.mxu0 0.0
        %652 = vmatprep.subr.mxu0 0.0
        %653 = vmatpush1.msra.mxu0 0.0
        %654 = vmatprep.subr.mxu0 0.0
        %655 = vmatpush1.msra.mxu0 0.0
        %656 = vmatprep.subr.mxu0 0.0
        %657 = vmatpush1.msra.mxu0 0.0
        %658 = vmatprep.subr.mxu0 0.0
        %659 = vmatpush1.msra.mxu0 0.0
        %660 = vmatprep.subr.mxu0 0.0
        %661 = vmatpush1.msra.mxu0 0.0
        %662 = vmatprep.subr.mxu0 0.0
        %663 = vmatpush1.msra.mxu0 0.0
        %664 = vmatprep.subr.mxu0 0.0
        %665 = vmatpush1.msra.mxu0 0.0
        %666 = vmatprep.mubr.f32.mxu0 0.0
        %667 = vmatmul.mubr.f32.gmra.mrb[0].mxu0 %v465
        %v668 = vpop.f32.mrb[0].mxu0
        %v669 = vadd.f32 %v527, %v668
        %v670 = vpop.f32.mrb[0].mxu0
        %671 = vdwg.mxu0
        %672 = vmatprep.subr.mxu0 0.0
        %673 = vmatpush1.xpose.msra.mxu0 %v600
        %674 = vmatprep.subr.mxu0 0.0
        %675 = vmatpush1.xpose.msra.mxu0 0.0
        %676 = vmatprep.subr.mxu0 0.0
        %677 = vmatpush1.xpose.msra.mxu0 0.0
        %678 = vmatprep.subr.mxu0 0.0
        %679 = vmatpush1.xpose.msra.mxu0 0.0
        %680 = vmatprep.subr.mxu0 0.0
        %681 = vmatpush1.xpose.msra.mxu0 0.0
        %682 = vmatprep.subr.mxu0 0.0
        %683 = vmatpush1.xpose.msra.mxu0 0.0
        %684 = vmatprep.subr.mxu0 0.0
        %685 = vmatpush1.xpose.msra.mxu0 0.0
        %686 = vmatprep.subr.mxu0 0.0
        %687 = vmatpush1.xpose.msra.mxu0 0.0
        %688 = vmatprep.subr.mxu0 0.0
        %689 = vmatpush1.xpose.msra.mxu0 0.0
        %690 = vmatprep.subr.mxu0 0.0
        %691 = vmatpush1.xpose.msra.mxu0 0.0
        %692 = vmatprep.subr.mxu0 0.0
        %693 = vmatpush1.xpose.msra.mxu0 0.0
        %694 = vmatprep.subr.mxu0 0.0
        %695 = vmatpush1.xpose.msra.mxu0 0.0
        %696 = vmatprep.subr.mxu0 0.0
        %697 = vmatpush1.xpose.msra.mxu0 0.0
        %698 = vmatprep.subr.mxu0 0.0
        %699 = vmatpush1.xpose.msra.mxu0 0.0
        %700 = vmatprep.subr.mxu0 0.0
        %701 = vmatpush1.xpose.msra.mxu0 0.0
        %702 = vmatprep.subr.mxu0 0.0
        %703 = vmatpush1.xpose.msra.mxu0 0.0
        %704 = vmatprep.subr.mxu0 0.0
        %705 = vmatpush1.xpose.msra.mxu0 0.0
        %706 = vmatprep.subr.mxu0 0.0
        %707 = vmatpush1.xpose.msra.mxu0 0.0
        %708 = vmatprep.subr.mxu0 0.0
        %709 = vmatpush1.xpose.msra.mxu0 0.0
        %710 = vmatprep.subr.mxu0 0.0
        %711 = vmatpush1.xpose.msra.mxu0 0.0
        %712 = vmatprep.subr.mxu0 0.0
        %713 = vmatpush1.xpose.msra.mxu0 0.0
        %714 = vmatprep.subr.mxu0 0.0
        %715 = vmatpush1.xpose.msra.mxu0 0.0
        %716 = vmatprep.subr.mxu0 0.0
        %717 = vmatpush1.xpose.msra.mxu0 0.0
        %718 = vmatprep.subr.mxu0 0.0
        %719 = vmatpush1.xpose.msra.mxu0 0.0
        %720 = vmatprep.subr.mxu0 0.0
        %721 = vmatpush1.xpose.msra.mxu0 0.0
        %722 = vmatprep.subr.mxu0 0.0
        %723 = vmatpush1.xpose.msra.mxu0 0.0
        %724 = vmatprep.subr.mxu0 0.0
        %725 = vmatpush1.xpose.msra.mxu0 0.0
        %726 = vmatprep.subr.mxu0 0.0
        %727 = vmatpush1.xpose.msra.mxu0 0.0
        %728 = vmatprep.subr.mxu0 0.0
        %729 = vmatpush1.xpose.msra.mxu0 0.0
        %730 = vmatprep.subr.mxu0 0.0
        %731 = vmatpush1.xpose.msra.mxu0 0.0
        %732 = vmatprep.subr.mxu0 0.0
        %733 = vmatpush1.xpose.msra.mxu0 0.0
        %734 = vmatprep.subr.mxu0 0.0
        %735 = vmatpush1.xpose.msra.mxu0 0.0
        %736 = vmatprep.mubr.f32.mxu0 0.0
        %737 = vmatmul.mubr.f32.gmra.mrb[0].mxu0 %v598
        %v738 = vpop.f32.mrb[0].mxu0
        %v739 = vadd.f32 0.0, %v738
        %v740 = vpop.f32.mrb[0].mxu0
        %741 = vdwg.mxu0
        %v742 = vmul.f32 %v739, 0.17677669
        %vm743 = vcmask 64512
        %v744 = vsel %vm743, %v742, -inf
        %745 = vmax.xlane.f32.xlu0 %v744
        %v746 = vpop.xlane.xlu0 %745
        %v747 = vsub.f32 %v742, %v746
        %v748 = vmul.f32 %v747, 1.442695
        %v749 = vpow.pop %v748
        %v750 = vsel %vm743, %v749, 0.0
        %751 = vadd.xlane.f32.xlu0 %v750
        %v752 = vpop.xlane.xlu0 %751
        %v753 = vrcp.pop %v752
        %v754 = vmul.f32 %v749, %v753
        %v756 = vsel %vm743, %v754, 0
        %758 = vmatprep.subr.mxu0 0.0
        %759 = vmatpush1.msra.mxu0 %v669
        %760 = vmatprep.subr.mxu0 0.0
        %761 = vmatpush1.msra.mxu0 0.0
        %762 = vmatprep.subr.mxu0 0.0
        %763 = vmatpush1.msra.mxu0 0.0
        %764 = vmatprep.subr.mxu0 0.0
        %765 = vmatpush1.msra.mxu0 0.0
        %766 = vmatprep.subr.mxu0 0.0
        %767 = vmatpush1.msra.mxu0 0.0
        %768 = vmatprep.subr.mxu0 0.0
        %769 = vmatpush1.msra.mxu0 0.0
        %770 = vmatprep.subr.mxu0 0.0
        %771 = vmatpush1.msra.mxu0 0.0
        %772 = vmatprep.subr.mxu0 0.0
        %773 = vmatpush1.msra.mxu0 0.0
        %774 = vmatprep.subr.mxu0 0.0
        %775 = vmatpush1.msra.mxu0 0.0
        %776 = vmatprep.subr.mxu0 0.0
        %777 = vmatpush1.msra.mxu0 0.0
        %778 = vmatprep.subr.mxu0 0.0
        %779 = vmatpush1.msra.mxu0 0.0
        %780 = vmatprep.subr.mxu0 0.0
        %781 = vmatpush1.msra.mxu0 0.0
        %782 = vmatprep.subr.mxu0 0.0
        %783 = vmatpush1.msra.mxu0 0.0
        %784 = vmatprep.subr.mxu0 0.0
        %785 = vmatpush1.msra.mxu0 0.0
        %786 = vmatprep.subr.mxu0 0.0
        %787 = vmatpush1.msra.mxu0 0.0
        %788 = vmatprep.subr.mxu0 0.0
        %789 = vmatpush1.msra.mxu0 0.0
        %790 = vmatprep.subr.mxu0 0.0
        %791 = vmatpush1.msra.mxu0 0.0
        %792 = vmatprep.subr.mxu0 0.0
        %793 = vmatpush1.msra.mxu0 0.0
        %794 = vmatprep.subr.mxu0 0.0
        %795 = vmatpush1.msra.mxu0 0.0
        %796 = vmatprep.subr.mxu0 0.0
        %797 = vmatpush1.msra.mxu0 0.0
        %798 = vmatprep.subr.mxu0 0.0
        %799 = vmatpush1.msra.mxu0 0.0
        %800 = vmatprep.subr.mxu0 0.0
        %801 = vmatpush1.msra.mxu0 0.0
        %802 = vmatprep.subr.mxu0 0.0
        %803 = vmatpush1.msra.mxu0 0.0
        %804 = vmatprep.subr.mxu0 0.0
        %805 = vmatpush1.msra.mxu0 0.0
        %806 = vmatprep.subr.mxu0 0.0
        %807 = vmatpush1.msra.mxu0 0.0
        %808 = vmatprep.subr.mxu0 0.0
        %809 = vmatpush1.msra.mxu0 0.0
        %810 = vmatprep.subr.mxu0 0.0
        %811 = vmatpush1.msra.mxu0 0.0
        %812 = vmatprep.subr.mxu0 0.0
        %813 = vmatpush1.msra.mxu0 0.0
        %814 = vmatprep.subr.mxu0 0.0
        %815 = vmatpush1.msra.mxu0 0.0
        %816 = vmatprep.subr.mxu0 0.0
        %817 = vmatpush1.msra.mxu0 0.0
        %818 = vmatprep.subr.mxu0 0.0
        %819 = vmatpush1.msra.mxu0 0.0
        %820 = vmatprep.subr.mxu0 0.0
        %821 = vmatpush1.msra.mxu0 0.0
        %822 = vmatprep.mubr.f32.mxu0 0.0
        %823 = vmatmul.mubr.f32.gmra.mrb[0].mxu0 %v756
        %v824 = vpop.f32.mrb[0].mxu0
        %v825 = vadd.f32 0.0, %v824
        %v826 = vpop.f32.mrb[0].mxu0
        %827 = vdwg.mxu0
        %v828 = vld [vmem:[#allocation2] sm:$0xff]
        %v829 = vadd.f32 %v828, %v825
        %830 = vst [vmem:[#allocation2] sm:$0xff] %v829
        %p831 = scmp.eq.s32.totalorder %s35, 1
        // Predicated region
        $region81: #{tpu_custom_call.1} parent=55 // pred_check
          %p832 = pneg %p831
        $region82: #{tpu_custom_call.1} parent=55 // pred_check_branch
          %834 = sbr.rel (%p832) target = $region84
        $region83: #{tpu_custom_call.1} parent=55 // pred_region
          %v835 = vld [vmem:[#allocation2] sm:$0xff]
          %v836 = vmul.f32 %v835, 0.5
          %v837 = vld [vmem:[#allocation8] sm:$0xff]
          %v838 = vld [vmem:[#allocation8 + $0x8] sm:$0xff]
          %v839 = vld [vmem:[#allocation8 + $0x10] sm:$0xff]
          %v840 = vld [vmem:[#allocation8 + $0x18] sm:$0xff]
          %v841 = vld [vmem:[#allocation8 + $0x20] sm:$0xff]
          %v842 = vld [vmem:[#allocation8 + $0x28] sm:$0xff]
          %v843 = vld [vmem:[#allocation8 + $0x30] sm:$0xff]
          %v844 = vld [vmem:[#allocation8 + $0x38] sm:$0xff]
          %v845 = vld [vmem:[#allocation8 + $0x40] sm:$0xff]
          %v846 = vld [vmem:[#allocation8 + $0x48] sm:$0xff]
          %v847 = vld [vmem:[#allocation8 + $0x50] sm:$0xff]
          %v848 = vld [vmem:[#allocation8 + $0x58] sm:$0xff]
          %v849 = vld [vmem:[#allocation8 + $0x60] sm:$0xff]
          %v850 = vld [vmem:[#allocation8 + $0x68] sm:$0xff]
          %v851 = vld [vmem:[#allocation8 + $0x70] sm:$0xff]
          %v852 = vld [vmem:[#allocation8 + $0x78] sm:$0xff]
          %v853 = vld [vmem:[%s4] sm:$0x1]
          %v855 = vlaneseq
          %v856 = vshrl.u32 %v855, 7
          %v857 = vsub.s32 0, %v856
          %v858 = vrot.slane %v853, %v857
          %860 = vmatprep.subr.mxu0 0.0
          %861 = vmatpush1.msra.mxu0 %v837
          %862 = vmatprep.subr.mxu0 0.0
          %863 = vmatpush1.msra.mxu0 %v838
          %864 = vmatprep.subr.mxu0 0.0
          %865 = vmatpush1.msra.mxu0 %v839
          %866 = vmatprep.subr.mxu0 0.0
          %867 = vmatpush1.msra.mxu0 %v840
          %868 = vmatprep.subr.mxu0 0.0
          %869 = vmatpush1.msra.mxu0 %v841
          %870 = vmatprep.subr.mxu0 0.0
          %871 = vmatpush1.msra.mxu0 %v842
          %872 = vmatprep.subr.mxu0 0.0
          %873 = vmatpush1.msra.mxu0 %v843
          %874 = vmatprep.subr.mxu0 0.0
          %875 = vmatpush1.msra.mxu0 %v844
          %876 = vmatprep.subr.mxu0 0.0
          %877 = vmatpush1.msra.mxu0 %v845
          %878 = vmatprep.subr.mxu0 0.0
          %879 = vmatpush1.msra.mxu0 %v846
          %880 = vmatprep.subr.mxu0 0.0
          %881 = vmatpush1.msra.mxu0 %v847
          %882 = vmatprep.subr.mxu0 0.0
          %883 = vmatpush1.msra.mxu0 %v848
          %884 = vmatprep.subr.mxu0 0.0
          %885 = vmatpush1.msra.mxu0 %v849
          %886 = vmatprep.subr.mxu0 0.0
          %887 = vmatpush1.msra.mxu0 %v850
          %888 = vmatprep.subr.mxu0 0.0
          %889 = vmatpush1.msra.mxu0 %v851
          %890 = vmatprep.subr.mxu0 0.0
          %891 = vmatpush1.msra.mxu0 %v852
          %892 = vmatprep.subr.mxu0 0.0
          %893 = vmatpush1.msra.mxu0 0.0
          %894 = vmatprep.subr.mxu0 0.0
          %895 = vmatpush1.msra.mxu0 0.0
          %896 = vmatprep.subr.mxu0 0.0
          %897 = vmatpush1.msra.mxu0 0.0
          %898 = vmatprep.subr.mxu0 0.0
          %899 = vmatpush1.msra.mxu0 0.0
          %900 = vmatprep.subr.mxu0 0.0
          %901 = vmatpush1.msra.mxu0 0.0
          %902 = vmatprep.subr.mxu0 0.0
          %903 = vmatpush1.msra.mxu0 0.0
          %904 = vmatprep.subr.mxu0 0.0
          %905 = vmatpush1.msra.mxu0 0.0
          %906 = vmatprep.subr.mxu0 0.0
          %907 = vmatpush1.msra.mxu0 0.0
          %908 = vmatprep.subr.mxu0 0.0
          %909 = vmatpush1.msra.mxu0 0.0
          %910 = vmatprep.subr.mxu0 0.0
          %911 = vmatpush1.msra.mxu0 0.0
          %912 = vmatprep.subr.mxu0 0.0
          %913 = vmatpush1.msra.mxu0 0.0
          %914 = vmatprep.subr.mxu0 0.0
          %915 = vmatpush1.msra.mxu0 0.0
          %916 = vmatprep.subr.mxu0 0.0
          %917 = vmatpush1.msra.mxu0 0.0
          %918 = vmatprep.subr.mxu0 0.0
          %919 = vmatpush1.msra.mxu0 0.0
          %920 = vmatprep.subr.mxu0 0.0
          %921 = vmatpush1.msra.mxu0 0.0
          %922 = vmatprep.subr.mxu0 0.0
          %923 = vmatpush1.msra.mxu0 0.0
          %924 = vmatprep.mubr.f32.mxu0 0.0
          %925 = vmatmul.mubr.f32.gmra.mrb[0].mxu0 %v836
          %v926 = vpop.f32.mrb[0].mxu0
          %v927 = vadd.f32 %v858, %v926
          %v928 = vpop.f32.mrb[0].mxu0
          %929 = vdwg.mxu0
          %v930 = vadd.f32 %v465, %v927
          %v931 = vmul.f32 %v930, %v930
          %v932 = vrot.slane %v931, 4
          %v933 = vadd.f32 %v931, %v932
          %v934 = vrot.slane %v933, 2
          %v935 = vadd.f32 %v933, %v934
          %v936 = vrot.slane %v935, 1
          %v937 = vadd.f32 %v935, %v936
          %v938 = vmax.f32 %v937, 1e-24
          %v939 = vrsqrt.pop %v938
          %v940 = vmul.f32 %v930, %v939
          %v941 = vld [vmem:[#allocation9] sm:$0xff]
          %v942 = vld [vmem:[#allocation9 + $0x8] sm:$0xff]
          %v943 = vld [vmem:[#allocation9 + $0x10] sm:$0xff]
          %v944 = vld [vmem:[#allocation9 + $0x18] sm:$0xff]
          %v945 = vld [vmem:[#allocation9 + $0x20] sm:$0xff]
          %v946 = vld [vmem:[#allocation9 + $0x28] sm:$0xff]
          %v947 = vld [vmem:[#allocation9 + $0x30] sm:$0xff]
          %v948 = vld [vmem:[#allocation9 + $0x38] sm:$0xff]
          %v949 = vld [vmem:[#allocation9 + $0x40] sm:$0xff]
          %v950 = vld [vmem:[#allocation9 + $0x48] sm:$0xff]
          %v951 = vld [vmem:[#allocation9 + $0x50] sm:$0xff]
          %v952 = vld [vmem:[#allocation9 + $0x58] sm:$0xff]
          %v953 = vld [vmem:[#allocation9 + $0x60] sm:$0xff]
          %v954 = vld [vmem:[#allocation9 + $0x68] sm:$0xff]
          %v955 = vld [vmem:[#allocation9 + $0x70] sm:$0xff]
          %v956 = vld [vmem:[#allocation9 + $0x78] sm:$0xff]
          %v957 = vld [vmem:[%s6] sm:$0x1]
          %v959 = vlaneseq
          %v960 = vshrl.u32 %v959, 7
          %v961 = vsub.s32 0, %v960
          %v962 = vrot.slane %v957, %v961
          %964 = vmatprep.subr.mxu0 0.0
          %965 = vmatpush1.msra.mxu0 %v941
          %966 = vmatprep.subr.mxu0 0.0
          %967 = vmatpush1.msra.mxu0 %v942
          %968 = vmatprep.subr.mxu0 0.0
          %969 = vmatpush1.msra.mxu0 %v943
          %970 = vmatprep.subr.mxu0 0.0
          %971 = vmatpush1.msra.mxu0 %v944
          %972 = vmatprep.subr.mxu0 0.0
          %973 = vmatpush1.msra.mxu0 %v945
          %974 = vmatprep.subr.mxu0 0.0
          %975 = vmatpush1.msra.mxu0 %v946
          %976 = vmatprep.subr.mxu0 0.0
          %977 = vmatpush1.msra.mxu0 %v947
          %978 = vmatprep.subr.mxu0 0.0
          %979 = vmatpush1.msra.mxu0 %v948
          %980 = vmatprep.subr.mxu0 0.0
          %981 = vmatpush1.msra.mxu0 %v949
          %982 = vmatprep.subr.mxu0 0.0
          %983 = vmatpush1.msra.mxu0 %v950
          %984 = vmatprep.subr.mxu0 0.0
          %985 = vmatpush1.msra.mxu0 %v951
          %986 = vmatprep.subr.mxu0 0.0
          %987 = vmatpush1.msra.mxu0 %v952
          %988 = vmatprep.subr.mxu0 0.0
          %989 = vmatpush1.msra.mxu0 %v953
          %990 = vmatprep.subr.mxu0 0.0
          %991 = vmatpush1.msra.mxu0 %v954
          %992 = vmatprep.subr.mxu0 0.0
          %993 = vmatpush1.msra.mxu0 %v955
          %994 = vmatprep.subr.mxu0 0.0
          %995 = vmatpush1.msra.mxu0 %v956
          %996 = vmatprep.subr.mxu0 0.0
          %997 = vmatpush1.msra.mxu0 0.0
          %998 = vmatprep.subr.mxu0 0.0
          %999 = vmatpush1.msra.mxu0 0.0
          %1000 = vmatprep.subr.mxu0 0.0
          %1001 = vmatpush1.msra.mxu0 0.0
          %1002 = vmatprep.subr.mxu0 0.0
          %1003 = vmatpush1.msra.mxu0 0.0
          %1004 = vmatprep.subr.mxu0 0.0
          %1005 = vmatpush1.msra.mxu0 0.0
          %1006 = vmatprep.subr.mxu0 0.0
          %1007 = vmatpush1.msra.mxu0 0.0
          %1008 = vmatprep.subr.mxu0 0.0
          %1009 = vmatpush1.msra.mxu0 0.0
          %1010 = vmatprep.subr.mxu0 0.0
          %1011 = vmatpush1.msra.mxu0 0.0
          %1012 = vmatprep.subr.mxu0 0.0
          %1013 = vmatpush1.msra.mxu0 0.0
          %1014 = vmatprep.subr.mxu0 0.0
          %1015 = vmatpush1.msra.mxu0 0.0
          %1016 = vmatprep.subr.mxu0 0.0
          %1017 = vmatpush1.msra.mxu0 0.0
          %1018 = vmatprep.subr.mxu0 0.0
          %1019 = vmatpush1.msra.mxu0 0.0
          %1020 = vmatprep.subr.mxu0 0.0
          %1021 = vmatpush1.msra.mxu0 0.0
          %1022 = vmatprep.subr.mxu0 0.0
          %1023 = vmatpush1.msra.mxu0 0.0
          %1024 = vmatprep.subr.mxu0 0.0
          %1025 = vmatpush1.msra.mxu0 0.0
          %1026 = vmatprep.subr.mxu0 0.0
          %1027 = vmatpush1.msra.mxu0 0.0
          %1028 = vmatprep.mubr.f32.mxu0 0.0
          %1029 = vmatmul.mubr.f32.gmra.mrb[0].mxu0 %v940
          %v1030 = vpop.f32.mrb[0].mxu0
          %v1031 = vadd.f32 %v962, %v1030
          %v1032 = vpop.f32.mrb[0].mxu0
          %1033 = vdwg.mxu0
          %v1034 = vld [vmem:[#allocation11] sm:$0xff]
          %v1035 = vld [vmem:[#allocation11 + $0x8] sm:$0xff]
          %v1036 = vld [vmem:[#allocation11 + $0x10] sm:$0xff]
          %v1037 = vld [vmem:[#allocation11 + $0x18] sm:$0xff]
          %v1038 = vld [vmem:[#allocation11 + $0x20] sm:$0xff]
          %v1039 = vld [vmem:[#allocation11 + $0x28] sm:$0xff]
          %v1040 = vld [vmem:[#allocation11 + $0x30] sm:$0xff]
          %v1041 = vld [vmem:[#allocation11 + $0x38] sm:$0xff]
          %v1042 = vld [vmem:[#allocation11 + $0x40] sm:$0xff]
          %v1043 = vld [vmem:[#allocation11 + $0x48] sm:$0xff]
          %v1044 = vld [vmem:[#allocation11 + $0x50] sm:$0xff]
          %v1045 = vld [vmem:[#allocation11 + $0x58] sm:$0xff]
          %v1046 = vld [vmem:[#allocation11 + $0x60] sm:$0xff]
          %v1047 = vld [vmem:[#allocation11 + $0x68] sm:$0xff]
          %v1048 = vld [vmem:[#allocation11 + $0x70] sm:$0xff]
          %v1049 = vld [vmem:[#allocation11 + $0x78] sm:$0xff]
          %v1050 = vld [vmem:[%s8] sm:$0x1]
          %v1052 = vlaneseq
          %v1053 = vshrl.u32 %v1052, 7
          %v1054 = vsub.s32 0, %v1053
          %v1055 = vrot.slane %v1050, %v1054
          %1057 = vmatprep.subr.mxu0 0.0
          %1058 = vmatpush1.msra.mxu0 %v1034
          %1059 = vmatprep.subr.mxu0 0.0
          %1060 = vmatpush1.msra.mxu0 %v1035
          %1061 = vmatprep.subr.mxu0 0.0
          %1062 = vmatpush1.msra.mxu0 %v1036
          %1063 = vmatprep.subr.mxu0 0.0
          %1064 = vmatpush1.msra.mxu0 %v1037
          %1065 = vmatprep.subr.mxu0 0.0
          %1066 = vmatpush1.msra.mxu0 %v1038
          %1067 = vmatprep.subr.mxu0 0.0
          %1068 = vmatpush1.msra.mxu0 %v1039
          %1069 = vmatprep.subr.mxu0 0.0
          %1070 = vmatpush1.msra.mxu0 %v1040
          %1071 = vmatprep.subr.mxu0 0.0
          %1072 = vmatpush1.msra.mxu0 %v1041
          %1073 = vmatprep.subr.mxu0 0.0
          %1074 = vmatpush1.msra.mxu0 %v1042
          %1075 = vmatprep.subr.mxu0 0.0
          %1076 = vmatpush1.msra.mxu0 %v1043
          %1077 = vmatprep.subr.mxu0 0.0
          %1078 = vmatpush1.msra.mxu0 %v1044
          %1079 = vmatprep.subr.mxu0 0.0
          %1080 = vmatpush1.msra.mxu0 %v1045
          %1081 = vmatprep.subr.mxu0 0.0
          %1082 = vmatpush1.msra.mxu0 %v1046
          %1083 = vmatprep.subr.mxu0 0.0
          %1084 = vmatpush1.msra.mxu0 %v1047
          %1085 = vmatprep.subr.mxu0 0.0
          %1086 = vmatpush1.msra.mxu0 %v1048
          %1087 = vmatprep.subr.mxu0 0.0
          %1088 = vmatpush1.msra.mxu0 %v1049
          %1089 = vmatprep.subr.mxu0 0.0
          %1090 = vmatpush1.msra.mxu0 0.0
          %1091 = vmatprep.subr.mxu0 0.0
          %1092 = vmatpush1.msra.mxu0 0.0
          %1093 = vmatprep.subr.mxu0 0.0
          %1094 = vmatpush1.msra.mxu0 0.0
          %1095 = vmatprep.subr.mxu0 0.0
          %1096 = vmatpush1.msra.mxu0 0.0
          %1097 = vmatprep.subr.mxu0 0.0
          %1098 = vmatpush1.msra.mxu0 0.0
          %1099 = vmatprep.subr.mxu0 0.0
          %1100 = vmatpush1.msra.mxu0 0.0
          %1101 = vmatprep.subr.mxu0 0.0
          %1102 = vmatpush1.msra.mxu0 0.0
          %1103 = vmatprep.subr.mxu0 0.0
          %1104 = vmatpush1.msra.mxu0 0.0
          %1105 = vmatprep.subr.mxu0 0.0
          %1106 = vmatpush1.msra.mxu0 0.0
          %1107 = vmatprep.subr.mxu0 0.0
          %1108 = vmatpush1.msra.mxu0 0.0
          %1109 = vmatprep.subr.mxu0 0.0
          %1110 = vmatpush1.msra.mxu0 0.0
          %1111 = vmatprep.subr.mxu0 0.0
          %1112 = vmatpush1.msra.mxu0 0.0
          %1113 = vmatprep.subr.mxu0 0.0
          %1114 = vmatpush1.msra.mxu0 0.0
          %1115 = vmatprep.subr.mxu0 0.0
          %1116 = vmatpush1.msra.mxu0 0.0
          %1117 = vmatprep.subr.mxu0 0.0
          %1118 = vmatpush1.msra.mxu0 0.0
          %1119 = vmatprep.subr.mxu0 0.0
          %1120 = vmatpush1.msra.mxu0 0.0
          %1121 = vmatprep.mubr.f32.mxu0 0.0
          %1122 = vmatmul.mubr.f32.gmra.mrb[0].mxu0 %v1031
          %v1123 = vpop.f32.mrb[0].mxu0
          %v1124 = vadd.f32 %v1055, %v1123
          %v1125 = vpop.f32.mrb[0].mxu0
          %1126 = vdwg.mxu0
          %vm1127 = vcmp.ge.f32.partialorder %v1124, 0.0
          %v1128 = vmul.f32 %v1124, 0.01
          %v1129 = vsel %vm1127, %v1124, %v1128
          %v1130 = vadd.f32 %v940, %v1129
          %v1131 = vmul.f32 %v1130, %v1130
          %v1132 = vrot.slane %v1131, 4
          %v1133 = vadd.f32 %v1131, %v1132
          %v1134 = vrot.slane %v1133, 2
          %v1135 = vadd.f32 %v1133, %v1134
          %v1136 = vrot.slane %v1135, 1
          %v1137 = vadd.f32 %v1135, %v1136
          %v1138 = vmax.f32 %v1137, 1e-24
          %v1139 = vrsqrt.pop %v1138
          %v1140 = vmul.f32 %v1130, %v1139
          %1141 = vst [vmem:[%s455] sm:$0xff] %v1140
        $region84: #{tpu_custom_call.1} parent=55 // pred_fallthru
          _
        %s1142 = sand.u32 %s254, 1
        %s1143 = scalar_lea.sflag [#allocation5], %s1142
        %s1144 = sand.u32 %s254, 1
        %s1145 = smul.addr %s1144, 8
        %s1146 = scalar_lea.vmem [#allocation12], %s1145
        // Predicated region
        $region85: #{tpu_custom_call.1} parent=55 // pred_check
          %p1147 = pneg %p264
        $region86: #{tpu_custom_call.1} parent=55 // pred_check_branch
          %1149 = sbr.rel (%p1147) target = $region88
        $region87: #{tpu_custom_call.1} parent=55 // pred_region
          %s1151 = ssub.s32 128, 128
          %1152 = vsyncadd %s1143, %s1151
          %s1153 = smul.addr %s34, 128
          %s1154 = scalar_lea.hbm %s9, %s1153
          %s1156 = sshll.u32 %s1146, 4
          %s1157 = int_to_ptr.vmem [resolvable:$true] %s1156
          %1159 = dma.vmem_to_hbm [thread:$0]  %s1157, 128, %s1154, %s1143
        $region88: #{tpu_custom_call.1} parent=55 // pred_fallthru
          _
      $region56: #{tpu_custom_call.1} parent=5 // pred_fallthru
        _
      %p1160 = scmp.le.s32.totalorder 2, %s25
      // Predicated region
      $region89: #{tpu_custom_call.1} parent=5 // pred_check
        %p1161 = pneg %p1160
      $region90: #{tpu_custom_call.1} parent=5 // pred_check_branch
        %1163 = sbr.rel (%p1161) target = $region92
      $region91: #{tpu_custom_call.1} parent=5 // pred_region
        %s1164 = ssub.s32 %s25, 2
        // Predicated region
        $region93: #{tpu_custom_call.1} parent=91 // pred_check
          %p1165 = pneg %p270
        $region94: #{tpu_custom_call.1} parent=91 // pred_check_branch
          %1167 = sbr.rel (%p1165) target = $region96
        $region95: #{tpu_custom_call.1} parent=91 // pred_region
          %s1168 = sand.u32 %s255, 1
          %s1169 = scalar_lea.sflag [#allocation5], %s1168
          %s1170 = sand.u32 %s255, 1
          %s1171 = smul.addr %s1170, 8
          %s1172 = scalar_lea.vmem [#allocation12], %s1171
          %1173 = dma.done %s1169, 128
        $region96: #{tpu_custom_call.1} parent=91 // pred_fallthru
          _
      $region92: #{tpu_custom_call.1} parent=5 // pred_fallthru
        _
    $region6: #{tpu_custom_call.1} parent=1 // loop_footer
      %s29 = sadd.s32 1, %s25
    $region7: #{tpu_custom_call.1} parent=1 // loop_footer_branch
      %24 = sbr.rel target = $region3
    $region8: #{tpu_custom_call.1} parent=1 // loop_exit
      _
    %1174 = vsyncpa [#allocation4], 1
    %s1175 = scalar_lea.sflag [#allocation4], 1
    %1176 = vsyncpa %s1175, 1
    %1177 = vsyncpa [#allocation7], 1
    %s1178 = scalar_lea.sflag [#allocation7], 1
    %1179 = vsyncpa %s1178, 1
    %1180 = vsyncpa [#allocation10], 1
    %1181 = vsyncpa [#allocation5], 1
    %s1182 = scalar_lea.sflag [#allocation5], 1
    %1183 = vsyncpa %s1182, 1

// kernel: tpu_custom_call.1
$region0: #{tpu_custom_call.1}
  #allocation0 [shape = 'u32[]', space=smem, size = 0x4, offset = 0x4, fixed_abs, tag = 'smem constant byte address 0x4 - core index']
  #allocation1 [shape = 'u32[144,128]{1,0:T(1,128)}', space=vmem, size = 0x12000, scoped, tag = 'internal scratch']
  #allocation2 [shape = 'f32[8,128]{1,0:T(8,128)}', space=vmem, size = 0x1000, scoped, tag = 'scratch operand']
  %s0 = inlined_call_operand.hbm [shape: f32[16,128], index: 0, kind: input, shape index: {}]
  %s1 = inlined_call_operand.hbm [shape: f32[2,128,384], index: 1, kind: input, shape index: {}]
  %s2 = inlined_call_operand.vmem [shape: f32[2,1,384], index: 2, kind: input, shape index: {}]
  %s3 = inlined_call_operand.hbm [shape: f32[128,128], index: 3, kind: input, shape index: {}]
  %s4 = inlined_call_operand.vmem [shape: f32[1,128], index: 4, kind: input, shape index: {}]
  %s5 = inlined_call_operand.hbm [shape: f32[128,128], index: 5, kind: input, shape index: {}]
  %s6 = inlined_call_operand.vmem [shape: f32[1,128], index: 6, kind: input, shape index: {}]
  %s7 = inlined_call_operand.hbm [shape: f32[128,128], index: 7, kind: input, shape index: {}]
  %s8 = inlined_call_operand.vmem [shape: f32[1,128], index: 8, kind: input, shape index: {}]
  %s9 = inlined_call_operand.hbm [shape: f32[16,128], index: 9, kind: output, shape index: {}]
  %s10 = sld [smem:[#allocation0]]
  $region97: #{tpu_custom_call.1} parent=0
    _
  %s12 = ssub.s32 1, %s10
  %s13 = scalar_select 0, %s12, %s10
  $region1: #{tpu_custom_call.1} parent=0
    #allocation3 [shape = 'u8[8192]{0}', space=vmem, size = 0x2000, scoped, tag = 'input window, operand 0']
    #allocation4 [shape = 's32[2]{0}', space=sflag, size = 0x8, scoped, tag = 'scoped memory for tpu_custom_call.1']
    #allocation5 [shape = 's32[2]{0}', space=sflag, size = 0x8, scoped, tag = 'scoped memory for tpu_custom_call.1']
    #allocation6 [shape = 'u8[393216]{0}', space=vmem, size = 0x60000, scoped, tag = 'input window, operand 1']
    #allocation7 [shape = 's32[2]{0}', space=sflag, size = 0x8, scoped, tag = 'scoped memory for tpu_custom_call.1']
    #allocation8 [shape = 'u8[65536]{0}', space=vmem, size = 0x10000, scoped, tag = 'input window, operand 3, single buffered']
    #allocation9 [shape = 'u8[65536]{0}', space=vmem, size = 0x10000, scoped, tag = 'input window, operand 5, single buffered']
    #allocation10 [shape = 's32[1]{0}', space=sflag, size = 0x4, scoped, tag = 'scoped memory for tpu_custom_call.1']
    #allocation11 [shape = 'u8[65536]{0}', space=vmem, size = 0x10000, scoped, tag = 'input window, operand 7, single buffered']
    #allocation12 [shape = 'u8[8192]{0}', space=vmem, size = 0x2000, scoped, tag = 'output window, operand 0']
    %14 = vsyncpa [#allocation4], 0
    %s15 = scalar_lea.sflag [#allocation4], 1
    %16 = vsyncpa %s15, 0
    %17 = vsyncpa [#allocation7], 0
    %s18 = scalar_lea.sflag [#allocation7], 1
    %19 = vsyncpa %s18, 0
    %20 = vsyncpa [#allocation10], 0
    %21 = vsyncpa [#allocation5], 0
    %s22 = scalar_lea.sflag [#allocation5], 1
    %23 = vsyncpa %s22, 0
    loop: start=0, step=1, limit=6
    $region2: #{tpu_custom_call.1} parent=1 // loop_pre_header
      _
    $region3: #{tpu_custom_call.1} parent=1 // loop_header
      %s25 = sphi 0, %s29
      %p26 = scmp.ge.s32.totalorder %s25, 6
      %s32 = sphi 0, %s44
      %s33 = sphi 0, %s40
      %s34 = sphi 0, %s32
      %s35 = sphi 0, %s33
      %s36 = sphi 0, %s34
      %s37 = sphi 0, %s35
      %s47 = sphi 0, %s49
      %s50 = sphi 0, %s47
      %s51 = sphi 0, %s50
      %s67 = sphi 0, %s51
      %s73 = sphi 0, %s75
      %s76 = sphi 0, %s73
      %s77 = sphi 0, %s76
      %s93 = sphi 0, %s77
      %s99 = sphi 0, %s101
      %s102 = sphi 0, %s99
      %s103 = sphi 0, %s102
      %s119 = sphi 0, %s103
      %s123 = sphi 0, %s123
      %s125 = sphi 0, %s123
      %s126 = sphi 0, %s125
      %s140 = sphi 0, %s126
      %s144 = sphi 0, %s144
      %s146 = sphi 0, %s144
      %s147 = sphi 0, %s146
      %s161 = sphi 0, %s147
      %s165 = sphi 0, %s165
      %s167 = sphi 0, %s165
      %s168 = sphi 0, %s167
      %s182 = sphi 0, %s168
      %s186 = sphi 0, %s186
      %s188 = sphi 0, %s186
      %s189 = sphi 0, %s188
      %s203 = sphi 0, %s189
      %s207 = sphi 0, %s207
      %s209 = sphi 0, %s207
      %s210 = sphi 0, %s209
      %s224 = sphi 0, %s210
      %s228 = sphi 0, %s228
      %s230 = sphi 0, %s228
      %s231 = sphi 0, %s230
      %s245 = sphi 0, %s231
      %s251 = sphi 0, %s253
      %s254 = sphi 0, %s251
      %s255 = sphi 0, %s254
      %s271 = sphi 0, %s255
    $region4: #{tpu_custom_call.1} parent=1 // loop_header_branch
      %28 = sbr.rel (%p26) target = $region8
    $region5: #{tpu_custom_call.1} parent=1 // loop_body
      %s30 = ssub.s32 %s25, 1
      %s31 = ssub.s32 %s25, 2
      %s38 = sadd.s32 1, %s33
      %p39 = scmp.ge.s32.totalorder %s38, 2
      %s40 = scalar_select %p39, 0, %s38
      %s41 = sadd.s32 1, %s32
      %s42 = scalar_select %p39, %s41, %s32
      %p43 = scmp.ge.s32.totalorder %s42, 2
      %s44 = scalar_select %p43, 0, %s42
      %s45 = ssub.s32 %s32, %s44
      %p46 = scmp.eq.s32.totalorder %s45, 0
      %s48 = sadd.s32 %s47, 1
      %s49 = scalar_select %p46, %s47, %s48
      %p52 = pneg %p46
      %p53 = scmp.eq.s32.totalorder %s25, 3
      %p54 = por %p52, %p53
      %p55 = scmp.ne.s32.totalorder %s47, %s50
      %p56 = scmp.eq.s32.totalorder %s25, 0
      %p57 = por %p55, %p56
      %p58 = scmp.ne.s32.totalorder %s47, %s50
      %p59 = scmp.eq.s32.totalorder %s30, 3
      %p60 = por %p58, %p59
      %p61 = scmp.ne.s32.totalorder %s50, %s51
      %p62 = scmp.eq.s32.totalorder %s30, 0
      %p63 = por %p61, %p62
      %p64 = scmp.ne.s32.totalorder %s50, %s51
      %p65 = scmp.eq.s32.totalorder %s31, 3
      %p66 = por %p64, %p65
      %p68 = scmp.ne.s32.totalorder %s51, %s67
      %p69 = scmp.eq.s32.totalorder %s31, 0
      %p70 = por %p68, %p69
      %s71 = ssub.s32 %s33, %s40
      %p72 = scmp.eq.s32.totalorder %s71, 0
      %s74 = sadd.s32 %s73, 1
      %s75 = scalar_select %p72, %s73, %s74
      %p78 = pneg %p72
      %p79 = scmp.eq.s32.totalorder %s25, 3
      %p80 = por %p78, %p79
      %p81 = scmp.ne.s32.totalorder %s73, %s76
      %p82 = scmp.eq.s32.totalorder %s25, 0
      %p83 = por %p81, %p82
      %p84 = scmp.ne.s32.totalorder %s73, %s76
      %p85 = scmp.eq.s32.totalorder %s30, 3
      %p86 = por %p84, %p85
      %p87 = scmp.ne.s32.totalorder %s76, %s77
      %p88 = scmp.eq.s32.totalorder %s30, 0
      %p89 = por %p87, %p88
      %p90 = scmp.ne.s32.totalorder %s76, %s77
      %p91 = scmp.eq.s32.totalorder %s31, 3
      %p92 = por %p90, %p91
      %p94 = scmp.ne.s32.totalorder %s77, %s93
      %p95 = scmp.eq.s32.totalorder %s31, 0
      %p96 = por %p94, %p95
      %s97 = ssub.s32 %s33, %s40
      %p98 = scmp.eq.s32.totalorder %s97, 0
      %s100 = sadd.s32 %s99, 1
      %s101 = scalar_select %p98, %s99, %s100
      %p104 = pneg %p98
      %p105 = scmp.eq.s32.totalorder %s25, 3
      %p106 = por %p104, %p105
      %p107 = scmp.ne.s32.totalorder %s99, %s102
      %p108 = scmp.eq.s32.totalorder %s25, 0
      %p109 = por %p107, %p108
      %p110 = scmp.ne.s32.totalorder %s99, %s102
      %p111 = scmp.eq.s32.totalorder %s30, 3
      %p112 = por %p110, %p111
      %p113 = scmp.ne.s32.totalorder %s102, %s103
      %p114 = scmp.eq.s32.totalorder %s30, 0
      %p115 = por %p113, %p114
      %p116 = scmp.ne.s32.totalorder %s102, %s103
      %p117 = scmp.eq.s32.totalorder %s31, 3
      %p118 = por %p116, %p117
      %p120 = scmp.ne.s32.totalorder %s103, %s119
      %p121 = scmp.eq.s32.totalorder %s31, 0
      %p122 = por %p120, %p121
      %s124 = sadd.s32 %s123, 1
      %p127 = scmp.eq.s32.totalorder %s25, 3
      %p128 = scmp.ne.s32.totalorder %s123, %s125
      %p129 = scmp.eq.s32.totalorder %s25, 0
      %p130 = por %p128, %p129
      %p131 = scmp.ne.s32.totalorder %s123, %s125
      %p132 = scmp.eq.s32.totalorder %s30, 3
      %p133 = por %p131, %p132
      %p134 = scmp.ne.s32.totalorder %s125, %s126
      %p135 = scmp.eq.s32.totalorder %s30, 0
      %p136 = por %p134, %p135
      %p137 = scmp.ne.s32.totalorder %s125, %s126
      %p138 = scmp.eq.s32.totalorder %s31, 3
      %p139 = por %p137, %p138
      %p141 = scmp.ne.s32.totalorder %s126, %s140
      %p142 = scmp.eq.s32.totalorder %s31, 0
      %p143 = por %p141, %p142
      %s145 = sadd.s32 %s144, 1
      %p148 = scmp.eq.s32.totalorder %s25, 3
      %p149 = scmp.ne.s32.totalorder %s144, %s146
      %p150 = scmp.eq.s32.totalorder %s25, 0
      %p151 = por %p149, %p150
      %p152 = scmp.ne.s32.totalorder %s144, %s146
      %p153 = scmp.eq.s32.totalorder %s30, 3
      %p154 = por %p152, %p153
      %p155 = scmp.ne.s32.totalorder %s146, %s147
      %p156 = scmp.eq.s32.totalorder %s30, 0
      %p157 = por %p155, %p156
      %p158 = scmp.ne.s32.totalorder %s146, %s147
      %p159 = scmp.eq.s32.totalorder %s31, 3
      %p160 = por %p158, %p159
      %p162 = scmp.ne.s32.totalorder %s147, %s161
      %p163 = scmp.eq.s32.totalorder %s31, 0
      %p164 = por %p162, %p163
      %s166 = sadd.s32 %s165, 1
      %p169 = scmp.eq.s32.totalorder %s25, 3
      %p170 = scmp.ne.s32.totalorder %s165, %s167
      %p171 = scmp.eq.s32.totalorder %s25, 0
      %p172 = por %p170, %p171
      %p173 = scmp.ne.s32.totalorder %s165, %s167
      %p174 = scmp.eq.s32.totalorder %s30, 3
      %p175 = por %p173, %p174
      %p176 = scmp.ne.s32.totalorder %s167, %s168
      %p177 = scmp.eq.s32.totalorder %s30, 0
      %p178 = por %p176, %p177
      %p179 = scmp.ne.s32.totalorder %s167, %s168
      %p180 = scmp.eq.s32.totalorder %s31, 3
      %p181 = por %p179, %p180
      %p183 = scmp.ne.s32.totalorder %s168, %s182
      %p184 = scmp.eq.s32.totalorder %s31, 0
      %p185 = por %p183, %p184
      %s187 = sadd.s32 %s186, 1
      %p190 = scmp.eq.s32.totalorder %s25, 3
      %p191 = scmp.ne.s32.totalorder %s186, %s188
      %p192 = scmp.eq.s32.totalorder %s25, 0
      %p193 = por %p191, %p192
      %p194 = scmp.ne.s32.totalorder %s186, %s188
      %p195 = scmp.eq.s32.totalorder %s30, 3
      %p196 = por %p194, %p195
      %p197 = scmp.ne.s32.totalorder %s188, %s189
      %p198 = scmp.eq.s32.totalorder %s30, 0
      %p199 = por %p197, %p198
      %p200 = scmp.ne.s32.totalorder %s188, %s189
      %p201 = scmp.eq.s32.totalorder %s31, 3
      %p202 = por %p200, %p201
      %p204 = scmp.ne.s32.totalorder %s189, %s203
      %p205 = scmp.eq.s32.totalorder %s31, 0
      %p206 = por %p204, %p205
      %s208 = sadd.s32 %s207, 1
      %p211 = scmp.eq.s32.totalorder %s25, 3
      %p212 = scmp.ne.s32.totalorder %s207, %s209
      %p213 = scmp.eq.s32.totalorder %s25, 0
      %p214 = por %p212, %p213
      %p215 = scmp.ne.s32.totalorder %s207, %s209
      %p216 = scmp.eq.s32.totalorder %s30, 3
      %p217 = por %p215, %p216
      %p218 = scmp.ne.s32.totalorder %s209, %s210
      %p219 = scmp.eq.s32.totalorder %s30, 0
      %p220 = por %p218, %p219
      %p221 = scmp.ne.s32.totalorder %s209, %s210
      %p222 = scmp.eq.s32.totalorder %s31, 3
      %p223 = por %p221, %p222
      %p225 = scmp.ne.s32.totalorder %s210, %s224
      %p226 = scmp.eq.s32.totalorder %s31, 0
      %p227 = por %p225, %p226
      %s229 = sadd.s32 %s228, 1
      %p232 = scmp.eq.s32.totalorder %s25, 3
      %p233 = scmp.ne.s32.totalorder %s228, %s230
      %p234 = scmp.eq.s32.totalorder %s25, 0
      %p235 = por %p233, %p234
      %p236 = scmp.ne.s32.totalorder %s228, %s230
      %p237 = scmp.eq.s32.totalorder %s30, 3
      %p238 = por %p236, %p237
      %p239 = scmp.ne.s32.totalorder %s230, %s231
      %p240 = scmp.eq.s32.totalorder %s30, 0
      %p241 = por %p239, %p240
      %p242 = scmp.ne.s32.totalorder %s230, %s231
      %p243 = scmp.eq.s32.totalorder %s31, 3
      %p244 = por %p242, %p243
      %p246 = scmp.ne.s32.totalorder %s231, %s245
      %p247 = scmp.eq.s32.totalorder %s31, 0
      %p248 = por %p246, %p247
      %s249 = ssub.s32 %s32, %s44
      %p250 = scmp.eq.s32.totalorder %s249, 0
      %s252 = sadd.s32 %s251, 1
      %s253 = scalar_select %p250, %s251, %s252
      %p256 = pneg %p250
      %p257 = scmp.eq.s32.totalorder %s25, 3
      %p258 = por %p256, %p257
      %p259 = scmp.ne.s32.totalorder %s251, %s254
      %p260 = scmp.eq.s32.totalorder %s25, 0
      %p261 = por %p259, %p260
      %p262 = scmp.ne.s32.totalorder %s251, %s254
      %p263 = scmp.eq.s32.totalorder %s30, 3
      %p264 = por %p262, %p263
      %p265 = scmp.ne.s32.totalorder %s254, %s255
      %p266 = scmp.eq.s32.totalorder %s30, 0
      %p267 = por %p265, %p266
      %p268 = scmp.ne.s32.totalorder %s254, %s255
      %p269 = scmp.eq.s32.totalorder %s31, 3
      %p270 = por %p268, %p269
      %p272 = scmp.ne.s32.totalorder %s255, %s271
      %p273 = scmp.eq.s32.totalorder %s31, 0
      %p274 = por %p272, %p273
      %p275 = scmp.le.s32.totalorder 1, %s25
      %p276 = scmp.lt.s32.totalorder %s25, 5
      %p277 = pnand %p275, %p276
      %p278 = pneg %p277
      // Predicated region
      $region9: #{tpu_custom_call.1} parent=5 // pred_check
        _
      $region10: #{tpu_custom_call.1} parent=5 // pred_check_branch
        %280 = sbr.rel (%p277) target = $region12
      $region11: #{tpu_custom_call.1} parent=5 // pred_region
        %s281 = ssub.s32 %s25, 1
        // Predicated region
        $region13: #{tpu_custom_call.1} parent=11 // pred_check
          %p282 = pneg %p136
        $region14: #{tpu_custom_call.1} parent=11 // pred_check_branch
          %284 = sbr.rel (%p282) target = $region16
        $region15: #{tpu_custom_call.1} parent=11 // pred_region
          %s286 = ssub.s32 2048, 2048
          %287 = vsyncadd [#allocation7], %s286
          %s288 = sshll.u32 [#allocation8], 4
          %s289 = int_to_ptr.vmem [resolvable:$true] %s288
          %294 = dma.hbm_to_vmem [thread:$0]  %s3, 2048, %s289, [#allocation7], 128, 128, 8
        $region16: #{tpu_custom_call.1} parent=11 // pred_fallthru
          _
        // Predicated region
        $region17: #{tpu_custom_call.1} parent=11 // pred_check
          %p295 = pneg %p157
        $region18: #{tpu_custom_call.1} parent=11 // pred_check_branch
          %297 = sbr.rel (%p295) target = $region20
        $region19: #{tpu_custom_call.1} parent=11 // pred_region
          _
        $region20: #{tpu_custom_call.1} parent=11 // pred_fallthru
          _
        // Predicated region
        $region21: #{tpu_custom_call.1} parent=11 // pred_check
          %p298 = pneg %p178
        $region22: #{tpu_custom_call.1} parent=11 // pred_check_branch
          %300 = sbr.rel (%p298) target = $region24
        $region23: #{tpu_custom_call.1} parent=11 // pred_region
          %s302 = ssub.s32 2048, 2048
          %303 = vsyncadd [#allocation10], %s302
          %s304 = sshll.u32 [#allocation9], 4
          %s305 = int_to_ptr.vmem [resolvable:$true] %s304
          %310 = dma.hbm_to_vmem [thread:$0]  %s5, 2048, %s305, [#allocation10], 128, 128, 8
        $region24: #{tpu_custom_call.1} parent=11 // pred_fallthru
          _
        // Predicated region
        $region25: #{tpu_custom_call.1} parent=11 // pred_check
          %p311 = pneg %p199
        $region26: #{tpu_custom_call.1} parent=11 // pred_check_branch
          %313 = sbr.rel (%p311) target = $region28
        $region27: #{tpu_custom_call.1} parent=11 // pred_region
          _
        $region28: #{tpu_custom_call.1} parent=11 // pred_fallthru
          _
        // Predicated region
        $region29: #{tpu_custom_call.1} parent=11 // pred_check
          %p314 = pneg %p220
        $region30: #{tpu_custom_call.1} parent=11 // pred_check_branch
          %316 = sbr.rel (%p314) target = $region32
        $region31: #{tpu_custom_call.1} parent=11 // pred_region
          %s318 = ssub.s32 2048, 2048
          %319 = vsyncadd [#allocation10], %s318
          %s320 = sshll.u32 [#allocation11], 4
          %s321 = int_to_ptr.vmem [resolvable:$true] %s320
          %326 = dma.hbm_to_vmem [thread:$0]  %s7, 2048, %s321, [#allocation10], 128, 128, 8
        $region32: #{tpu_custom_call.1} parent=11 // pred_fallthru
          _
        // Predicated region
        $region33: #{tpu_custom_call.1} parent=11 // pred_check
          %p327 = pneg %p241
        $region34: #{tpu_custom_call.1} parent=11 // pred_check_branch
          %329 = sbr.rel (%p327) target = $region36
        $region35: #{tpu_custom_call.1} parent=11 // pred_region
          _
        $region36: #{tpu_custom_call.1} parent=11 // pred_fallthru
          _
      $region12: #{tpu_custom_call.1} parent=5 // pred_fallthru
        _
      %p330 = scmp.lt.s32.totalorder %s25, 4
      // Predicated region
      $region37: #{tpu_custom_call.1} parent=5 // pred_check
        %p331 = pneg %p330
      $region38: #{tpu_custom_call.1} parent=5 // pred_check_branch
        %333 = sbr.rel (%p331) target = $region40
      $region39: #{tpu_custom_call.1} parent=5 // pred_region
        // Predicated region
        $region41: #{tpu_custom_call.1} parent=39 // pred_check
          %p334 = pneg %p57
        $region42: #{tpu_custom_call.1} parent=39 // pred_check_branch
          %336 = sbr.rel (%p334) target = $region44
        $region43: #{tpu_custom_call.1} parent=39 // pred_region
          %s337 = sand.u32 %s47, 1
          %s338 = scalar_lea.sflag [#allocation4], %s337
          %s339 = sand.u32 %s47, 1
          %s340 = smul.addr %s339, 8
          %s341 = scalar_lea.vmem [#allocation3], %s340
          %s343 = ssub.s32 128, 128
          %344 = vsyncadd %s338, %s343
          %s345 = smul.addr %s32, 128
          %s346 = scalar_lea.hbm %s0, %s345
          %s348 = sshll.u32 %s341, 4
          %s349 = int_to_ptr.vmem [resolvable:$true] %s348
          %351 = dma.hbm_to_vmem [thread:$0]  %s346, 128, %s349, %s338
        $region44: #{tpu_custom_call.1} parent=39 // pred_fallthru
          _
        // Predicated region
        $region45: #{tpu_custom_call.1} parent=39 // pred_check
          %p352 = pneg %p83
        $region46: #{tpu_custom_call.1} parent=39 // pred_check_branch
          %354 = sbr.rel (%p352) target = $region48
        $region47: #{tpu_custom_call.1} parent=39 // pred_region
          %s355 = sand.u32 %s25, 1
          %s356 = scalar_lea.sflag [#allocation7], %s355
          %s357 = sand.u32 %s73, 1
          %s358 = smul.addr %s357, 384
          %s359 = scalar_lea.vmem [#allocation6], %s358
          %s361 = ssub.s32 6144, 6144
          %362 = vsyncadd %s356, %s361
          %s363 = smul.addr %s33, 48
          %s364 = smul.addr %s363, 128
          %s365 = scalar_lea.hbm %s1, %s364
          %s366 = sshll.u32 %s359, 4
          %s367 = int_to_ptr.vmem [resolvable:$true] %s366
          %372 = dma.hbm_to_vmem [thread:$0]  %s365, 6144, %s367, %s356, 384, 384, 24
        $region48: #{tpu_custom_call.1} parent=39 // pred_fallthru
          _
        // Predicated region
        $region49: #{tpu_custom_call.1} parent=39 // pred_check
          %p373 = pneg %p109
        $region50: #{tpu_custom_call.1} parent=39 // pred_check_branch
          %375 = sbr.rel (%p373) target = $region52
        $region51: #{tpu_custom_call.1} parent=39 // pred_region
          %p376 = scmp.lt.s32.totalorder %s33, 1
          %s377 = scalar_select %p376, %s33, 1
          %s378 = smul.addr %s377, 3
          %s379 = scalar_lea.vmem %s2, %s378
        $region52: #{tpu_custom_call.1} parent=39 // pred_fallthru
          _
      $region40: #{tpu_custom_call.1} parent=5 // pred_fallthru
        _
      %p380 = scmp.le.s32.totalorder 1, %s25
      %p381 = scmp.lt.s32.totalorder %s25, 5
      %p382 = pnand %p380, %p381
      %p383 = pneg %p382
      // Predicated region
      $region53: #{tpu_custom_call.1} parent=5 // pred_check
        _
      $region54: #{tpu_custom_call.1} parent=5 // pred_check_branch
        %385 = sbr.rel (%p382) target = $region56
      $region55: #{tpu_custom_call.1} parent=5 // pred_region
        %s386 = ssub.s32 %s25, 1
        %s387 = sand.u32 %s50, 1
        %s388 = scalar_lea.sflag [#allocation4], %s387
        %s389 = sand.u32 %s50, 1
        %s390 = smul.addr %s389, 8
        %s391 = scalar_lea.vmem [#allocation3], %s390
        // Predicated region
        $region57: #{tpu_custom_call.1} parent=55 // pred_check
          %p392 = pneg %p63
        $region58: #{tpu_custom_call.1} parent=55 // pred_check_branch
          %394 = sbr.rel (%p392) target = $region60
        $region59: #{tpu_custom_call.1} parent=55 // pred_region
          %395 = dma.done %s388, 128
        $region60: #{tpu_custom_call.1} parent=55 // pred_fallthru
          _
        %s396 = sand.u32 %s30, 1
        %s397 = scalar_lea.sflag [#allocation7], %s396
        %s398 = sand.u32 %s76, 1
        %s399 = smul.addr %s398, 384
        %s400 = scalar_lea.vmem [#allocation6], %s399
        // Predicated region
        $region61: #{tpu_custom_call.1} parent=55 // pred_check
          %p401 = pneg %p89
        $region62: #{tpu_custom_call.1} parent=55 // pred_check_branch
          %403 = sbr.rel (%p401) target = $region64
        $region63: #{tpu_custom_call.1} parent=55 // pred_region
          %404 = dma.done %s397, 6144
        $region64: #{tpu_custom_call.1} parent=55 // pred_fallthru
          _
        // Predicated region
        $region65: #{tpu_custom_call.1} parent=55 // pred_check
          %p405 = pneg %p136
        $region66: #{tpu_custom_call.1} parent=55 // pred_check_branch
          %407 = sbr.rel (%p405) target = $region68
        $region67: #{tpu_custom_call.1} parent=55 // pred_region
          %408 = dma.done [#allocation7], 2048
        $region68: #{tpu_custom_call.1} parent=55 // pred_fallthru
          _
        // Predicated region
        $region69: #{tpu_custom_call.1} parent=55 // pred_check
          %p409 = pneg %p178
        $region70: #{tpu_custom_call.1} parent=55 // pred_check_branch
          %411 = sbr.rel (%p409) target = $region72
        $region71: #{tpu_custom_call.1} parent=55 // pred_region
          %412 = dma.done [#allocation10], 2048
        $region72: #{tpu_custom_call.1} parent=55 // pred_fallthru
          _
        // Predicated region
        $region73: #{tpu_custom_call.1} parent=55 // pred_check
          %p413 = pneg %p220
        $region74: #{tpu_custom_call.1} parent=55 // pred_check_branch
          %415 = sbr.rel (%p413) target = $region76
        $region75: #{tpu_custom_call.1} parent=55 // pred_region
          %416 = dma.done [#allocation10], 2048
        $region76: #{tpu_custom_call.1} parent=55 // pred_fallthru
          _
        %s417 = sand.u32 %s50, 1
        %s418 = scalar_lea.sflag [#allocation4], %s417
        %s419 = sand.u32 %s50, 1
        %s420 = smul.addr %s419, 8
        %s421 = scalar_lea.vmem [#allocation3], %s420
        %p422 = pneg %p63
        %p423 = pneg %p60
        %s424 = sand.u32 %s30, 1
        %s425 = scalar_lea.sflag [#allocation7], %s424
        %s426 = sand.u32 %s76, 1
        %s427 = smul.addr %s426, 384
        %s428 = scalar_lea.vmem [#allocation6], %s427
        %p429 = pneg %p89
        %p430 = pneg %p86
        %p431 = scmp.lt.s32.totalorder %s35, 1
        %s432 = scalar_select %p431, %s35, 1
        %s433 = smul.addr %s432, 3
        %s434 = scalar_lea.vmem %s2, %s433
        %p435 = pneg %p115
        %p436 = pneg %p112
        %p437 = pneg %p136
        %p438 = pneg %p133
        %p439 = pneg %p157
        %p440 = pneg %p154
        %p441 = pneg %p178
        %p442 = pneg %p175
        %p443 = pneg %p199
        %p444 = pneg %p196
        %p445 = pneg %p220
        %p446 = pneg %p217
        %p447 = pneg %p241
        %p448 = pneg %p238
        %p449 = pneg %p267
        %p450 = pneg %p264
        %s451 = sand.u32 %s254, 1
        %s452 = scalar_lea.sflag [#allocation5], %s451
        %s453 = sand.u32 %s254, 1
        %s454 = smul.addr %s453, 8
        %s455 = scalar_lea.vmem [#allocation12], %s454
        %p456 = scmp.lt.s32.totalorder %s35, 1
        %s457 = scalar_select %p456, %s35, 1
        %s458 = smul.addr %s457, 3
        %s459 = scalar_lea.vmem %s2, %s458
        %p460 = scmp.eq.s32.totalorder %s35, 0
        // Predicated region
        $region77: #{tpu_custom_call.1} parent=55 // pred_check
          %p461 = pneg %p460
        $region78: #{tpu_custom_call.1} parent=55 // pred_check_branch
          %463 = sbr.rel (%p461) target = $region80
        $region79: #{tpu_custom_call.1} parent=55 // pred_region
          %464 = vst [vmem:[#allocation2] sm:$0xff] 0.0
        $region80: #{tpu_custom_call.1} parent=55 // pred_fallthru
          _
        %v465 = vld [vmem:[%s391] sm:$0xff]
        %v466 = vld [vmem:[%s400] sm:$0xff]
        %v467 = vld [vmem:[%s400 + $0x8] sm:$0xff]
        %v468 = vld [vmem:[%s400 + $0x10] sm:$0xff]
        %v469 = vld [vmem:[%s400 + $0x18] sm:$0xff]
        %v470 = vld [vmem:[%s400 + $0x20] sm:$0xff]
        %v471 = vld [vmem:[%s400 + $0x28] sm:$0xff]
        %v472 = vld [vmem:[%s400 + $0x30] sm:$0xff]
        %v473 = vld [vmem:[%s400 + $0x38] sm:$0xff]
        %v474 = vld [vmem:[%s400 + $0x40] sm:$0xff]
        %v475 = vld [vmem:[%s400 + $0x48] sm:$0xff]
        %v476 = vld [vmem:[%s400 + $0x50] sm:$0xff]
        %v477 = vld [vmem:[%s400 + $0x58] sm:$0xff]
        %v478 = vld [vmem:[%s400 + $0x60] sm:$0xff]
        %v479 = vld [vmem:[%s400 + $0x68] sm:$0xff]
        %v480 = vld [vmem:[%s400 + $0x70] sm:$0xff]
        %v481 = vld [vmem:[%s400 + $0x78] sm:$0xff]
        %v482 = vld [vmem:[%s400 + $0x80] sm:$0xff]
        %v483 = vld [vmem:[%s400 + $0x88] sm:$0xff]
        %v484 = vld [vmem:[%s400 + $0x90] sm:$0xff]
        %v485 = vld [vmem:[%s400 + $0x98] sm:$0xff]
        %v486 = vld [vmem:[%s400 + $0xa0] sm:$0xff]
        %v487 = vld [vmem:[%s400 + $0xa8] sm:$0xff]
        %v488 = vld [vmem:[%s400 + $0xb0] sm:$0xff]
        %v489 = vld [vmem:[%s400 + $0xb8] sm:$0xff]
        %v490 = vld [vmem:[%s400 + $0xc0] sm:$0xff]
        %v491 = vld [vmem:[%s400 + $0xc8] sm:$0xff]
        %v492 = vld [vmem:[%s400 + $0xd0] sm:$0xff]
        %v493 = vld [vmem:[%s400 + $0xd8] sm:$0xff]
        %v494 = vld [vmem:[%s400 + $0xe0] sm:$0xff]
        %v495 = vld [vmem:[%s400 + $0xe8] sm:$0xff]
        %v496 = vld [vmem:[%s400 + $0xf0] sm:$0xff]
        %v497 = vld [vmem:[%s400 + $0xf8] sm:$0xff]
        %v498 = vld [vmem:[%s400 + $0x100] sm:$0xff]
        %v499 = vld [vmem:[%s400 + $0x108] sm:$0xff]
        %v500 = vld [vmem:[%s400 + $0x110] sm:$0xff]
        %v501 = vld [vmem:[%s400 + $0x118] sm:$0xff]
        %v502 = vld [vmem:[%s400 + $0x120] sm:$0xff]
        %v503 = vld [vmem:[%s400 + $0x128] sm:$0xff]
        %v504 = vld [vmem:[%s400 + $0x130] sm:$0xff]
        %v505 = vld [vmem:[%s400 + $0x138] sm:$0xff]
        %v506 = vld [vmem:[%s400 + $0x140] sm:$0xff]
        %v507 = vld [vmem:[%s400 + $0x148] sm:$0xff]
        %v508 = vld [vmem:[%s400 + $0x150] sm:$0xff]
        %v509 = vld [vmem:[%s400 + $0x158] sm:$0xff]
        %v510 = vld [vmem:[%s400 + $0x160] sm:$0xff]
        %v511 = vld [vmem:[%s400 + $0x168] sm:$0xff]
        %v512 = vld [vmem:[%s400 + $0x170] sm:$0xff]
        %v513 = vld [vmem:[%s400 + $0x178] sm:$0xff]
        %v514 = vld [vmem:[%s459] sm:$0x7]
        %v516 = vlaneseq
        %v517 = vshrl.u32 %v516, 7
        %v518 = vsub.s32 0, %v517
        %v519 = vrot.slane %v514, %v518
        %v520 = vlaneseq
        %v521 = vshrl.u32 %v520, 7
        %v522 = vsub.s32 1, %v521
        %v523 = vrot.slane %v514, %v522
        %v524 = vlaneseq
        %v525 = vshrl.u32 %v524, 7
        %v526 = vsub.s32 2, %v525
        %v527 = vrot.slane %v514, %v526
        %531 = vmatprep.subr.mxu0 %v467
        %532 = vmatpush1.msra.mxu0 %v466
        %533 = vmatprep.subr.mxu0 %v470
        %534 = vmatpush1.msra.mxu0 %v469
        %535 = vmatprep.subr.mxu0 %v473
        %536 = vmatpush1.msra.mxu0 %v472
        %537 = vmatprep.subr.mxu0 %v476
        %538 = vmatpush1.msra.mxu0 %v475
        %539 = vmatprep.subr.mxu0 %v479
        %540 = vmatpush1.msra.mxu0 %v478
        %541 = vmatprep.subr.mxu0 %v482
        %542 = vmatpush1.msra.mxu0 %v481
        %543 = vmatprep.subr.mxu0 %v485
        %544 = vmatpush1.msra.mxu0 %v484
        %545 = vmatprep.subr.mxu0 %v488
        %546 = vmatpush1.msra.mxu0 %v487
        %547 = vmatprep.subr.mxu0 %v491
        %548 = vmatpush1.msra.mxu0 %v490
        %549 = vmatprep.subr.mxu0 %v494
        %550 = vmatpush1.msra.mxu0 %v493
        %551 = vmatprep.subr.mxu0 %v497
        %552 = vmatpush1.msra.mxu0 %v496
        %553 = vmatprep.subr.mxu0 %v500
        %554 = vmatpush1.msra.mxu0 %v499
        %555 = vmatprep.subr.mxu0 %v503
        %556 = vmatpush1.msra.mxu0 %v502
        %557 = vmatprep.subr.mxu0 %v506
        %558 = vmatpush1.msra.mxu0 %v505
        %559 = vmatprep.subr.mxu0 %v509
        %560 = vmatpush1.msra.mxu0 %v508
        %561 = vmatprep.subr.mxu0 %v512
        %562 = vmatpush1.msra.mxu0 %v511
        %563 = vmatprep.subr.mxu0 0.0
        %564 = vmatpush1.msra.mxu0 0.0
        %565 = vmatprep.subr.mxu0 0.0
        %566 = vmatpush1.msra.mxu0 0.0
        %567 = vmatprep.subr.mxu0 0.0
        %568 = vmatpush1.msra.mxu0 0.0
        %569 = vmatprep.subr.mxu0 0.0
        %570 = vmatpush1.msra.mxu0 0.0
        %571 = vmatprep.subr.mxu0 0.0
        %572 = vmatpush1.msra.mxu0 0.0
        %573 = vmatprep.subr.mxu0 0.0
        %574 = vmatpush1.msra.mxu0 0.0
        %575 = vmatprep.subr.mxu0 0.0
        %576 = vmatpush1.msra.mxu0 0.0
        %577 = vmatprep.subr.mxu0 0.0
        %578 = vmatpush1.msra.mxu0 0.0
        %579 = vmatprep.subr.mxu0 0.0
        %580 = vmatpush1.msra.mxu0 0.0
        %581 = vmatprep.subr.mxu0 0.0
        %582 = vmatpush1.msra.mxu0 0.0
        %583 = vmatprep.subr.mxu0 0.0
        %584 = vmatpush1.msra.mxu0 0.0
        %585 = vmatprep.subr.mxu0 0.0
        %586 = vmatpush1.msra.mxu0 0.0
        %587 = vmatprep.subr.mxu0 0.0
        %588 = vmatpush1.msra.mxu0 0.0
        %589 = vmatprep.subr.mxu0 0.0
        %590 = vmatpush1.msra.mxu0 0.0
        %591 = vmatprep.subr.mxu0 0.0
        %592 = vmatpush1.msra.mxu0 0.0
        %593 = vmatprep.subr.mxu0 0.0
        %594 = vmatpush1.msra.mxu0 0.0
        %595 = vmatprep.mubr.f32.mxu0 0.0
        %596 = vmatmul.mubr.f32.gmra.mrb[0].mxu0 %v465
        %v597 = vpop.f32.mrb[0].mxu0
        %v598 = vadd.f32 %v519, %v597
        %v599 = vpop.f32.mrb[0].mxu0
        %v600 = vadd.f32 %v523, %v599
        %601 = vdwg.mxu0
        %602 = vmatprep.subr.mxu0 0.0
        %603 = vmatpush1.msra.mxu0 %v468
        %604 = vmatprep.subr.mxu0 0.0
        %605 = vmatpush1.msra.mxu0 %v471
        %606 = vmatprep.subr.mxu0 0.0
        %607 = vmatpush1.msra.mxu0 %v474
        %608 = vmatprep.subr.mxu0 0.0
        %609 = vmatpush1.msra.mxu0 %v477
        %610 = vmatprep.subr.mxu0 0.0
        %611 = vmatpush1.msra.mxu0 %v480
        %612 = vmatprep.subr.mxu0 0.0
        %613 = vmatpush1.msra.mxu0 %v483
        %614 = vmatprep.subr.mxu0 0.0
        %615 = vmatpush1.msra.mxu0 %v486
        %616 = vmatprep.subr.mxu0 0.0
        %617 = vmatpush1.msra.mxu0 %v489
        %618 = vmatprep.subr.mxu0 0.0
        %619 = vmatpush1.msra.mxu0 %v492
        %620 = vmatprep.subr.mxu0 0.0
        %621 = vmatpush1.msra.mxu0 %v495
        %622 = vmatprep.subr.mxu0 0.0
        %623 = vmatpush1.msra.mxu0 %v498
        %624 = vmatprep.subr.mxu0 0.0
        %625 = vmatpush1.msra.mxu0 %v501
        %626 = vmatprep.subr.mxu0 0.0
        %627 = vmatpush1.msra.mxu0 %v504
        %628 = vmatprep.subr.mxu0 0.0
        %629 = vmatpush1.msra.mxu0 %v507
        %630 = vmatprep.subr.mxu0 0.0
        %631 = vmatpush1.msra.mxu0 %v510
        %632 = vmatprep.subr.mxu0 0.0
        %633 = vmatpush1.msra.mxu0 %v513
        %634 = vmatprep.subr.mxu0 0.0
        %635 = vmatpush1.msra.mxu0 0.0
        %636 = vmatprep.subr.mxu0 0.0
        %637 = vmatpush1.msra.mxu0 0.0
        %638 = vmatprep.subr.mxu0 0.0
        %639 = vmatpush1.msra.mxu0 0.0
        %640 = vmatprep.subr.mxu0 0.0
        %641 = vmatpush1.msra.mxu0 0.0
        %642 = vmatprep.subr.mxu0 0.0
        %643 = vmatpush1.msra.mxu0 0.0
        %644 = vmatprep.subr.mxu0 0.0
        %645 = vmatpush1.msra.mxu0 0.0
        %646 = vmatprep.subr.mxu0 0.0
        %647 = vmatpush1.msra.mxu0 0.0
        %648 = vmatprep.subr.mxu0 0.0
        %649 = vmatpush1.msra.mxu0 0.0
        %650 = vmatprep.subr.mxu0 0.0
        %651 = vmatpush1.msra.mxu0 0.0
        %652 = vmatprep.subr.mxu0 0.0
        %653 = vmatpush1.msra.mxu0 0.0
        %654 = vmatprep.subr.mxu0 0.0
        %655 = vmatpush1.msra.mxu0 0.0
        %656 = vmatprep.subr.mxu0 0.0
        %657 = vmatpush1.msra.mxu0 0.0
        %658 = vmatprep.subr.mxu0 0.0
        %659 = vmatpush1.msra.mxu0 0.0
        %660 = vmatprep.subr.mxu0 0.0
        %661 = vmatpush1.msra.mxu0 0.0
        %662 = vmatprep.subr.mxu0 0.0
        %663 = vmatpush1.msra.mxu0 0.0
        %664 = vmatprep.subr.mxu0 0.0
        %665 = vmatpush1.msra.mxu0 0.0
        %666 = vmatprep.mubr.f32.mxu0 0.0
        %667 = vmatmul.mubr.f32.gmra.mrb[0].mxu0 %v465
        %v668 = vpop.f32.mrb[0].mxu0
        %v669 = vadd.f32 %v527, %v668
        %v670 = vpop.f32.mrb[0].mxu0
        %671 = vdwg.mxu0
        %672 = vmatprep.subr.mxu0 0.0
        %673 = vmatpush1.xpose.msra.mxu0 %v600
        %674 = vmatprep.subr.mxu0 0.0
        %675 = vmatpush1.xpose.msra.mxu0 0.0
        %676 = vmatprep.subr.mxu0 0.0
        %677 = vmatpush1.xpose.msra.mxu0 0.0
        %678 = vmatprep.subr.mxu0 0.0
        %679 = vmatpush1.xpose.msra.mxu0 0.0
        %680 = vmatprep.subr.mxu0 0.0
        %681 = vmatpush1.xpose.msra.mxu0 0.0
        %682 = vmatprep.subr.mxu0 0.0
        %683 = vmatpush1.xpose.msra.mxu0 0.0
        %684 = vmatprep.subr.mxu0 0.0
        %685 = vmatpush1.xpose.msra.mxu0 0.0
        %686 = vmatprep.subr.mxu0 0.0
        %687 = vmatpush1.xpose.msra.mxu0 0.0
        %688 = vmatprep.subr.mxu0 0.0
        %689 = vmatpush1.xpose.msra.mxu0 0.0
        %690 = vmatprep.subr.mxu0 0.0
        %691 = vmatpush1.xpose.msra.mxu0 0.0
        %692 = vmatprep.subr.mxu0 0.0
        %693 = vmatpush1.xpose.msra.mxu0 0.0
        %694 = vmatprep.subr.mxu0 0.0
        %695 = vmatpush1.xpose.msra.mxu0 0.0
        %696 = vmatprep.subr.mxu0 0.0
        %697 = vmatpush1.xpose.msra.mxu0 0.0
        %698 = vmatprep.subr.mxu0 0.0
        %699 = vmatpush1.xpose.msra.mxu0 0.0
        %700 = vmatprep.subr.mxu0 0.0
        %701 = vmatpush1.xpose.msra.mxu0 0.0
        %702 = vmatprep.subr.mxu0 0.0
        %703 = vmatpush1.xpose.msra.mxu0 0.0
        %704 = vmatprep.subr.mxu0 0.0
        %705 = vmatpush1.xpose.msra.mxu0 0.0
        %706 = vmatprep.subr.mxu0 0.0
        %707 = vmatpush1.xpose.msra.mxu0 0.0
        %708 = vmatprep.subr.mxu0 0.0
        %709 = vmatpush1.xpose.msra.mxu0 0.0
        %710 = vmatprep.subr.mxu0 0.0
        %711 = vmatpush1.xpose.msra.mxu0 0.0
        %712 = vmatprep.subr.mxu0 0.0
        %713 = vmatpush1.xpose.msra.mxu0 0.0
        %714 = vmatprep.subr.mxu0 0.0
        %715 = vmatpush1.xpose.msra.mxu0 0.0
        %716 = vmatprep.subr.mxu0 0.0
        %717 = vmatpush1.xpose.msra.mxu0 0.0
        %718 = vmatprep.subr.mxu0 0.0
        %719 = vmatpush1.xpose.msra.mxu0 0.0
        %720 = vmatprep.subr.mxu0 0.0
        %721 = vmatpush1.xpose.msra.mxu0 0.0
        %722 = vmatprep.subr.mxu0 0.0
        %723 = vmatpush1.xpose.msra.mxu0 0.0
        %724 = vmatprep.subr.mxu0 0.0
        %725 = vmatpush1.xpose.msra.mxu0 0.0
        %726 = vmatprep.subr.mxu0 0.0
        %727 = vmatpush1.xpose.msra.mxu0 0.0
        %728 = vmatprep.subr.mxu0 0.0
        %729 = vmatpush1.xpose.msra.mxu0 0.0
        %730 = vmatprep.subr.mxu0 0.0
        %731 = vmatpush1.xpose.msra.mxu0 0.0
        %732 = vmatprep.subr.mxu0 0.0
        %733 = vmatpush1.xpose.msra.mxu0 0.0
        %734 = vmatprep.subr.mxu0 0.0
        %735 = vmatpush1.xpose.msra.mxu0 0.0
        %736 = vmatprep.mubr.f32.mxu0 0.0
        %737 = vmatmul.mubr.f32.gmra.mrb[0].mxu0 %v598
        %v738 = vpop.f32.mrb[0].mxu0
        %v739 = vadd.f32 0.0, %v738
        %v740 = vpop.f32.mrb[0].mxu0
        %741 = vdwg.mxu0
        %v742 = vmul.f32 %v739, 0.17677669
        %vm743 = vcmask 64512
        %v744 = vsel %vm743, %v742, -inf
        %745 = vmax.xlane.f32.xlu0 %v744
        %v746 = vpop.xlane.xlu0 %745
        %v747 = vsub.f32 %v742, %v746
        %v748 = vmul.f32 %v747, 1.442695
        %v749 = vpow.pop %v748
        %v750 = vsel %vm743, %v749, 0.0
        %751 = vadd.xlane.f32.xlu0 %v750
        %v752 = vpop.xlane.xlu0 %751
        %v753 = vrcp.pop %v752
        %v754 = vmul.f32 %v749, %v753
        %v756 = vsel %vm743, %v754, 0
        %758 = vmatprep.subr.mxu0 0.0
        %759 = vmatpush1.msra.mxu0 %v669
        %760 = vmatprep.subr.mxu0 0.0
        %761 = vmatpush1.msra.mxu0 0.0
        %762 = vmatprep.subr.mxu0 0.0
        %763 = vmatpush1.msra.mxu0 0.0
        %764 = vmatprep.subr.mxu0 0.0
        %765 = vmatpush1.msra.mxu0 0.0
        %766 = vmatprep.subr.mxu0 0.0
        %767 = vmatpush1.msra.mxu0 0.0
        %768 = vmatprep.subr.mxu0 0.0
        %769 = vmatpush1.msra.mxu0 0.0
        %770 = vmatprep.subr.mxu0 0.0
        %771 = vmatpush1.msra.mxu0 0.0
        %772 = vmatprep.subr.mxu0 0.0
        %773 = vmatpush1.msra.mxu0 0.0
        %774 = vmatprep.subr.mxu0 0.0
        %775 = vmatpush1.msra.mxu0 0.0
        %776 = vmatprep.subr.mxu0 0.0
        %777 = vmatpush1.msra.mxu0 0.0
        %778 = vmatprep.subr.mxu0 0.0
        %779 = vmatpush1.msra.mxu0 0.0
        %780 = vmatprep.subr.mxu0 0.0
        %781 = vmatpush1.msra.mxu0 0.0
        %782 = vmatprep.subr.mxu0 0.0
        %783 = vmatpush1.msra.mxu0 0.0
        %784 = vmatprep.subr.mxu0 0.0
        %785 = vmatpush1.msra.mxu0 0.0
        %786 = vmatprep.subr.mxu0 0.0
        %787 = vmatpush1.msra.mxu0 0.0
        %788 = vmatprep.subr.mxu0 0.0
        %789 = vmatpush1.msra.mxu0 0.0
        %790 = vmatprep.subr.mxu0 0.0
        %791 = vmatpush1.msra.mxu0 0.0
        %792 = vmatprep.subr.mxu0 0.0
        %793 = vmatpush1.msra.mxu0 0.0
        %794 = vmatprep.subr.mxu0 0.0
        %795 = vmatpush1.msra.mxu0 0.0
        %796 = vmatprep.subr.mxu0 0.0
        %797 = vmatpush1.msra.mxu0 0.0
        %798 = vmatprep.subr.mxu0 0.0
        %799 = vmatpush1.msra.mxu0 0.0
        %800 = vmatprep.subr.mxu0 0.0
        %801 = vmatpush1.msra.mxu0 0.0
        %802 = vmatprep.subr.mxu0 0.0
        %803 = vmatpush1.msra.mxu0 0.0
        %804 = vmatprep.subr.mxu0 0.0
        %805 = vmatpush1.msra.mxu0 0.0
        %806 = vmatprep.subr.mxu0 0.0
        %807 = vmatpush1.msra.mxu0 0.0
        %808 = vmatprep.subr.mxu0 0.0
        %809 = vmatpush1.msra.mxu0 0.0
        %810 = vmatprep.subr.mxu0 0.0
        %811 = vmatpush1.msra.mxu0 0.0
        %812 = vmatprep.subr.mxu0 0.0
        %813 = vmatpush1.msra.mxu0 0.0
        %814 = vmatprep.subr.mxu0 0.0
        %815 = vmatpush1.msra.mxu0 0.0
        %816 = vmatprep.subr.mxu0 0.0
        %817 = vmatpush1.msra.mxu0 0.0
        %818 = vmatprep.subr.mxu0 0.0
        %819 = vmatpush1.msra.mxu0 0.0
        %820 = vmatprep.subr.mxu0 0.0
        %821 = vmatpush1.msra.mxu0 0.0
        %822 = vmatprep.mubr.f32.mxu0 0.0
        %823 = vmatmul.mubr.f32.gmra.mrb[0].mxu0 %v756
        %v824 = vpop.f32.mrb[0].mxu0
        %v825 = vadd.f32 0.0, %v824
        %v826 = vpop.f32.mrb[0].mxu0
        %827 = vdwg.mxu0
        %v828 = vld [vmem:[#allocation2] sm:$0xff]
        %v829 = vadd.f32 %v828, %v825
        %830 = vst [vmem:[#allocation2] sm:$0xff] %v829
        %p831 = scmp.eq.s32.totalorder %s35, 1
        // Predicated region
        $region81: #{tpu_custom_call.1} parent=55 // pred_check
          %p832 = pneg %p831
        $region82: #{tpu_custom_call.1} parent=55 // pred_check_branch
          %834 = sbr.rel (%p832) target = $region84
        $region83: #{tpu_custom_call.1} parent=55 // pred_region
          %v835 = vld [vmem:[#allocation2] sm:$0xff]
          %v836 = vmul.f32 %v835, 0.5
          %v837 = vld [vmem:[#allocation8] sm:$0xff]
          %v838 = vld [vmem:[#allocation8 + $0x8] sm:$0xff]
          %v839 = vld [vmem:[#allocation8 + $0x10] sm:$0xff]
          %v840 = vld [vmem:[#allocation8 + $0x18] sm:$0xff]
          %v841 = vld [vmem:[#allocation8 + $0x20] sm:$0xff]
          %v842 = vld [vmem:[#allocation8 + $0x28] sm:$0xff]
          %v843 = vld [vmem:[#allocation8 + $0x30] sm:$0xff]
          %v844 = vld [vmem:[#allocation8 + $0x38] sm:$0xff]
          %v845 = vld [vmem:[#allocation8 + $0x40] sm:$0xff]
          %v846 = vld [vmem:[#allocation8 + $0x48] sm:$0xff]
          %v847 = vld [vmem:[#allocation8 + $0x50] sm:$0xff]
          %v848 = vld [vmem:[#allocation8 + $0x58] sm:$0xff]
          %v849 = vld [vmem:[#allocation8 + $0x60] sm:$0xff]
          %v850 = vld [vmem:[#allocation8 + $0x68] sm:$0xff]
          %v851 = vld [vmem:[#allocation8 + $0x70] sm:$0xff]
          %v852 = vld [vmem:[#allocation8 + $0x78] sm:$0xff]
          %v853 = vld [vmem:[%s4] sm:$0x1]
          %v855 = vlaneseq
          %v856 = vshrl.u32 %v855, 7
          %v857 = vsub.s32 0, %v856
          %v858 = vrot.slane %v853, %v857
          %860 = vmatprep.subr.mxu0 0.0
          %861 = vmatpush1.msra.mxu0 %v837
          %862 = vmatprep.subr.mxu0 0.0
          %863 = vmatpush1.msra.mxu0 %v838
          %864 = vmatprep.subr.mxu0 0.0
          %865 = vmatpush1.msra.mxu0 %v839
          %866 = vmatprep.subr.mxu0 0.0
          %867 = vmatpush1.msra.mxu0 %v840
          %868 = vmatprep.subr.mxu0 0.0
          %869 = vmatpush1.msra.mxu0 %v841
          %870 = vmatprep.subr.mxu0 0.0
          %871 = vmatpush1.msra.mxu0 %v842
          %872 = vmatprep.subr.mxu0 0.0
          %873 = vmatpush1.msra.mxu0 %v843
          %874 = vmatprep.subr.mxu0 0.0
          %875 = vmatpush1.msra.mxu0 %v844
          %876 = vmatprep.subr.mxu0 0.0
          %877 = vmatpush1.msra.mxu0 %v845
          %878 = vmatprep.subr.mxu0 0.0
          %879 = vmatpush1.msra.mxu0 %v846
          %880 = vmatprep.subr.mxu0 0.0
          %881 = vmatpush1.msra.mxu0 %v847
          %882 = vmatprep.subr.mxu0 0.0
          %883 = vmatpush1.msra.mxu0 %v848
          %884 = vmatprep.subr.mxu0 0.0
          %885 = vmatpush1.msra.mxu0 %v849
          %886 = vmatprep.subr.mxu0 0.0
          %887 = vmatpush1.msra.mxu0 %v850
          %888 = vmatprep.subr.mxu0 0.0
          %889 = vmatpush1.msra.mxu0 %v851
          %890 = vmatprep.subr.mxu0 0.0
          %891 = vmatpush1.msra.mxu0 %v852
          %892 = vmatprep.subr.mxu0 0.0
          %893 = vmatpush1.msra.mxu0 0.0
          %894 = vmatprep.subr.mxu0 0.0
          %895 = vmatpush1.msra.mxu0 0.0
          %896 = vmatprep.subr.mxu0 0.0
          %897 = vmatpush1.msra.mxu0 0.0
          %898 = vmatprep.subr.mxu0 0.0
          %899 = vmatpush1.msra.mxu0 0.0
          %900 = vmatprep.subr.mxu0 0.0
          %901 = vmatpush1.msra.mxu0 0.0
          %902 = vmatprep.subr.mxu0 0.0
          %903 = vmatpush1.msra.mxu0 0.0
          %904 = vmatprep.subr.mxu0 0.0
          %905 = vmatpush1.msra.mxu0 0.0
          %906 = vmatprep.subr.mxu0 0.0
          %907 = vmatpush1.msra.mxu0 0.0
          %908 = vmatprep.subr.mxu0 0.0
          %909 = vmatpush1.msra.mxu0 0.0
          %910 = vmatprep.subr.mxu0 0.0
          %911 = vmatpush1.msra.mxu0 0.0
          %912 = vmatprep.subr.mxu0 0.0
          %913 = vmatpush1.msra.mxu0 0.0
          %914 = vmatprep.subr.mxu0 0.0
          %915 = vmatpush1.msra.mxu0 0.0
          %916 = vmatprep.subr.mxu0 0.0
          %917 = vmatpush1.msra.mxu0 0.0
          %918 = vmatprep.subr.mxu0 0.0
          %919 = vmatpush1.msra.mxu0 0.0
          %920 = vmatprep.subr.mxu0 0.0
          %921 = vmatpush1.msra.mxu0 0.0
          %922 = vmatprep.subr.mxu0 0.0
          %923 = vmatpush1.msra.mxu0 0.0
          %924 = vmatprep.mubr.f32.mxu0 0.0
          %925 = vmatmul.mubr.f32.gmra.mrb[0].mxu0 %v836
          %v926 = vpop.f32.mrb[0].mxu0
          %v927 = vadd.f32 %v858, %v926
          %v928 = vpop.f32.mrb[0].mxu0
          %929 = vdwg.mxu0
          %v930 = vadd.f32 %v465, %v927
          %v931 = vmul.f32 %v930, %v930
          %v932 = vrot.slane %v931, 4
          %v933 = vadd.f32 %v931, %v932
          %v934 = vrot.slane %v933, 2
          %v935 = vadd.f32 %v933, %v934
          %v936 = vrot.slane %v935, 1
          %v937 = vadd.f32 %v935, %v936
          %v938 = vmax.f32 %v937, 1e-24
          %v939 = vrsqrt.pop %v938
          %v940 = vmul.f32 %v930, %v939
          %v941 = vld [vmem:[#allocation9] sm:$0xff]
          %v942 = vld [vmem:[#allocation9 + $0x8] sm:$0xff]
          %v943 = vld [vmem:[#allocation9 + $0x10] sm:$0xff]
          %v944 = vld [vmem:[#allocation9 + $0x18] sm:$0xff]
          %v945 = vld [vmem:[#allocation9 + $0x20] sm:$0xff]
          %v946 = vld [vmem:[#allocation9 + $0x28] sm:$0xff]
          %v947 = vld [vmem:[#allocation9 + $0x30] sm:$0xff]
          %v948 = vld [vmem:[#allocation9 + $0x38] sm:$0xff]
          %v949 = vld [vmem:[#allocation9 + $0x40] sm:$0xff]
          %v950 = vld [vmem:[#allocation9 + $0x48] sm:$0xff]
          %v951 = vld [vmem:[#allocation9 + $0x50] sm:$0xff]
          %v952 = vld [vmem:[#allocation9 + $0x58] sm:$0xff]
          %v953 = vld [vmem:[#allocation9 + $0x60] sm:$0xff]
          %v954 = vld [vmem:[#allocation9 + $0x68] sm:$0xff]
          %v955 = vld [vmem:[#allocation9 + $0x70] sm:$0xff]
          %v956 = vld [vmem:[#allocation9 + $0x78] sm:$0xff]
          %v957 = vld [vmem:[%s6] sm:$0x1]
          %v959 = vlaneseq
          %v960 = vshrl.u32 %v959, 7
          %v961 = vsub.s32 0, %v960
          %v962 = vrot.slane %v957, %v961
          %964 = vmatprep.subr.mxu0 0.0
          %965 = vmatpush1.msra.mxu0 %v941
          %966 = vmatprep.subr.mxu0 0.0
          %967 = vmatpush1.msra.mxu0 %v942
          %968 = vmatprep.subr.mxu0 0.0
          %969 = vmatpush1.msra.mxu0 %v943
          %970 = vmatprep.subr.mxu0 0.0
          %971 = vmatpush1.msra.mxu0 %v944
          %972 = vmatprep.subr.mxu0 0.0
          %973 = vmatpush1.msra.mxu0 %v945
          %974 = vmatprep.subr.mxu0 0.0
          %975 = vmatpush1.msra.mxu0 %v946
          %976 = vmatprep.subr.mxu0 0.0
          %977 = vmatpush1.msra.mxu0 %v947
          %978 = vmatprep.subr.mxu0 0.0
          %979 = vmatpush1.msra.mxu0 %v948
          %980 = vmatprep.subr.mxu0 0.0
          %981 = vmatpush1.msra.mxu0 %v949
          %982 = vmatprep.subr.mxu0 0.0
          %983 = vmatpush1.msra.mxu0 %v950
          %984 = vmatprep.subr.mxu0 0.0
          %985 = vmatpush1.msra.mxu0 %v951
          %986 = vmatprep.subr.mxu0 0.0
          %987 = vmatpush1.msra.mxu0 %v952
          %988 = vmatprep.subr.mxu0 0.0
          %989 = vmatpush1.msra.mxu0 %v953
          %990 = vmatprep.subr.mxu0 0.0
          %991 = vmatpush1.msra.mxu0 %v954
          %992 = vmatprep.subr.mxu0 0.0
          %993 = vmatpush1.msra.mxu0 %v955
          %994 = vmatprep.subr.mxu0 0.0
          %995 = vmatpush1.msra.mxu0 %v956
          %996 = vmatprep.subr.mxu0 0.0
          %997 = vmatpush1.msra.mxu0 0.0
          %998 = vmatprep.subr.mxu0 0.0
          %999 = vmatpush1.msra.mxu0 0.0
          %1000 = vmatprep.subr.mxu0 0.0
          %1001 = vmatpush1.msra.mxu0 0.0
          %1002 = vmatprep.subr.mxu0 0.0
          %1003 = vmatpush1.msra.mxu0 0.0
          %1004 = vmatprep.subr.mxu0 0.0
          %1005 = vmatpush1.msra.mxu0 0.0
          %1006 = vmatprep.subr.mxu0 0.0
          %1007 = vmatpush1.msra.mxu0 0.0
          %1008 = vmatprep.subr.mxu0 0.0
          %1009 = vmatpush1.msra.mxu0 0.0
          %1010 = vmatprep.subr.mxu0 0.0
          %1011 = vmatpush1.msra.mxu0 0.0
          %1012 = vmatprep.subr.mxu0 0.0
          %1013 = vmatpush1.msra.mxu0 0.0
          %1014 = vmatprep.subr.mxu0 0.0
          %1015 = vmatpush1.msra.mxu0 0.0
          %1016 = vmatprep.subr.mxu0 0.0
          %1017 = vmatpush1.msra.mxu0 0.0
          %1018 = vmatprep.subr.mxu0 0.0
          %1019 = vmatpush1.msra.mxu0 0.0
          %1020 = vmatprep.subr.mxu0 0.0
          %1021 = vmatpush1.msra.mxu0 0.0
          %1022 = vmatprep.subr.mxu0 0.0
          %1023 = vmatpush1.msra.mxu0 0.0
          %1024 = vmatprep.subr.mxu0 0.0
          %1025 = vmatpush1.msra.mxu0 0.0
          %1026 = vmatprep.subr.mxu0 0.0
          %1027 = vmatpush1.msra.mxu0 0.0
          %1028 = vmatprep.mubr.f32.mxu0 0.0
          %1029 = vmatmul.mubr.f32.gmra.mrb[0].mxu0 %v940
          %v1030 = vpop.f32.mrb[0].mxu0
          %v1031 = vadd.f32 %v962, %v1030
          %v1032 = vpop.f32.mrb[0].mxu0
          %1033 = vdwg.mxu0
          %v1034 = vld [vmem:[#allocation11] sm:$0xff]
          %v1035 = vld [vmem:[#allocation11 + $0x8] sm:$0xff]
          %v1036 = vld [vmem:[#allocation11 + $0x10] sm:$0xff]
          %v1037 = vld [vmem:[#allocation11 + $0x18] sm:$0xff]
          %v1038 = vld [vmem:[#allocation11 + $0x20] sm:$0xff]
          %v1039 = vld [vmem:[#allocation11 + $0x28] sm:$0xff]
          %v1040 = vld [vmem:[#allocation11 + $0x30] sm:$0xff]
          %v1041 = vld [vmem:[#allocation11 + $0x38] sm:$0xff]
          %v1042 = vld [vmem:[#allocation11 + $0x40] sm:$0xff]
          %v1043 = vld [vmem:[#allocation11 + $0x48] sm:$0xff]
          %v1044 = vld [vmem:[#allocation11 + $0x50] sm:$0xff]
          %v1045 = vld [vmem:[#allocation11 + $0x58] sm:$0xff]
          %v1046 = vld [vmem:[#allocation11 + $0x60] sm:$0xff]
          %v1047 = vld [vmem:[#allocation11 + $0x68] sm:$0xff]
          %v1048 = vld [vmem:[#allocation11 + $0x70] sm:$0xff]
          %v1049 = vld [vmem:[#allocation11 + $0x78] sm:$0xff]
          %v1050 = vld [vmem:[%s8] sm:$0x1]
          %v1052 = vlaneseq
          %v1053 = vshrl.u32 %v1052, 7
          %v1054 = vsub.s32 0, %v1053
          %v1055 = vrot.slane %v1050, %v1054
          %1057 = vmatprep.subr.mxu0 0.0
          %1058 = vmatpush1.msra.mxu0 %v1034
          %1059 = vmatprep.subr.mxu0 0.0
          %1060 = vmatpush1.msra.mxu0 %v1035
          %1061 = vmatprep.subr.mxu0 0.0
          %1062 = vmatpush1.msra.mxu0 %v1036
          %1063 = vmatprep.subr.mxu0 0.0
          %1064 = vmatpush1.msra.mxu0 %v1037
          %1065 = vmatprep.subr.mxu0 0.0
          %1066 = vmatpush1.msra.mxu0 %v1038
          %1067 = vmatprep.subr.mxu0 0.0
          %1068 = vmatpush1.msra.mxu0 %v1039
          %1069 = vmatprep.subr.mxu0 0.0
          %1070 = vmatpush1.msra.mxu0 %v1040
          %1071 = vmatprep.subr.mxu0 0.0
          %1072 = vmatpush1.msra.mxu0 %v1041
          %1073 = vmatprep.subr.mxu0 0.0
          %1074 = vmatpush1.msra.mxu0 %v1042
          %1075 = vmatprep.subr.mxu0 0.0
          %1076 = vmatpush1.msra.mxu0 %v1043
          %1077 = vmatprep.subr.mxu0 0.0
          %1078 = vmatpush1.msra.mxu0 %v1044
          %1079 = vmatprep.subr.mxu0 0.0
          %1080 = vmatpush1.msra.mxu0 %v1045
          %1081 = vmatprep.subr.mxu0 0.0
          %1082 = vmatpush1.msra.mxu0 %v1046
          %1083 = vmatprep.subr.mxu0 0.0
          %1084 = vmatpush1.msra.mxu0 %v1047
          %1085 = vmatprep.subr.mxu0 0.0
          %1086 = vmatpush1.msra.mxu0 %v1048
          %1087 = vmatprep.subr.mxu0 0.0
          %1088 = vmatpush1.msra.mxu0 %v1049
          %1089 = vmatprep.subr.mxu0 0.0
          %1090 = vmatpush1.msra.mxu0 0.0
          %1091 = vmatprep.subr.mxu0 0.0
          %1092 = vmatpush1.msra.mxu0 0.0
          %1093 = vmatprep.subr.mxu0 0.0
          %1094 = vmatpush1.msra.mxu0 0.0
          %1095 = vmatprep.subr.mxu0 0.0
          %1096 = vmatpush1.msra.mxu0 0.0
          %1097 = vmatprep.subr.mxu0 0.0
          %1098 = vmatpush1.msra.mxu0 0.0
          %1099 = vmatprep.subr.mxu0 0.0
          %1100 = vmatpush1.msra.mxu0 0.0
          %1101 = vmatprep.subr.mxu0 0.0
          %1102 = vmatpush1.msra.mxu0 0.0
          %1103 = vmatprep.subr.mxu0 0.0
          %1104 = vmatpush1.msra.mxu0 0.0
          %1105 = vmatprep.subr.mxu0 0.0
          %1106 = vmatpush1.msra.mxu0 0.0
          %1107 = vmatprep.subr.mxu0 0.0
          %1108 = vmatpush1.msra.mxu0 0.0
          %1109 = vmatprep.subr.mxu0 0.0
          %1110 = vmatpush1.msra.mxu0 0.0
          %1111 = vmatprep.subr.mxu0 0.0
          %1112 = vmatpush1.msra.mxu0 0.0
          %1113 = vmatprep.subr.mxu0 0.0
          %1114 = vmatpush1.msra.mxu0 0.0
          %1115 = vmatprep.subr.mxu0 0.0
          %1116 = vmatpush1.msra.mxu0 0.0
          %1117 = vmatprep.subr.mxu0 0.0
          %1118 = vmatpush1.msra.mxu0 0.0
          %1119 = vmatprep.subr.mxu0 0.0
          %1120 = vmatpush1.msra.mxu0 0.0
          %1121 = vmatprep.mubr.f32.mxu0 0.0
          %1122 = vmatmul.mubr.f32.gmra.mrb[0].mxu0 %v1031
          %v1123 = vpop.f32.mrb[0].mxu0
          %v1124 = vadd.f32 %v1055, %v1123
          %v1125 = vpop.f32.mrb[0].mxu0
          %1126 = vdwg.mxu0
          %vm1127 = vcmp.ge.f32.partialorder %v1124, 0.0
          %v1128 = vmul.f32 %v1124, 0.01
          %v1129 = vsel %vm1127, %v1124, %v1128
          %v1130 = vadd.f32 %v940, %v1129
          %v1131 = vmul.f32 %v1130, %v1130
          %v1132 = vrot.slane %v1131, 4
          %v1133 = vadd.f32 %v1131, %v1132
          %v1134 = vrot.slane %v1133, 2
          %v1135 = vadd.f32 %v1133, %v1134
          %v1136 = vrot.slane %v1135, 1
          %v1137 = vadd.f32 %v1135, %v1136
          %v1138 = vmax.f32 %v1137, 1e-24
          %v1139 = vrsqrt.pop %v1138
          %v1140 = vmul.f32 %v1130, %v1139
          %1141 = vst [vmem:[%s455] sm:$0xff] %v1140
        $region84: #{tpu_custom_call.1} parent=55 // pred_fallthru
          _
        %s1142 = sand.u32 %s254, 1
        %s1143 = scalar_lea.sflag [#allocation5], %s1142
        %s1144 = sand.u32 %s254, 1
        %s1145 = smul.addr %s1144, 8
        %s1146 = scalar_lea.vmem [#allocation12], %s1145
        // Predicated region
        $region85: #{tpu_custom_call.1} parent=55 // pred_check
          %p1147 = pneg %p264
        $region86: #{tpu_custom_call.1} parent=55 // pred_check_branch
          %1149 = sbr.rel (%p1147) target = $region88
        $region87: #{tpu_custom_call.1} parent=55 // pred_region
          %s1151 = ssub.s32 128, 128
          %1152 = vsyncadd %s1143, %s1151
          %s1153 = smul.addr %s34, 128
          %s1154 = scalar_lea.hbm %s9, %s1153
          %s1156 = sshll.u32 %s1146, 4
          %s1157 = int_to_ptr.vmem [resolvable:$true] %s1156
          %1159 = dma.vmem_to_hbm [thread:$0]  %s1157, 128, %s1154, %s1143
        $region88: #{tpu_custom_call.1} parent=55 // pred_fallthru
          _
      $region56: #{tpu_custom_call.1} parent=5 // pred_fallthru
        _
      %p1160 = scmp.le.s32.totalorder 2, %s25
      // Predicated region
      $region89: #{tpu_custom_call.1} parent=5 // pred_check
        %p1161 = pneg %p1160
      $region90: #{tpu_custom_call.1} parent=5 // pred_check_branch
        %1163 = sbr.rel (%p1161) target = $region92
      $region91: #{tpu_custom_call.1} parent=5 // pred_region
        %s1164 = ssub.s32 %s25, 2
        // Predicated region
        $region93: #{tpu_custom_call.1} parent=91 // pred_check
          %p1165 = pneg %p270
        $region94: #{tpu_custom_call.1} parent=91 // pred_check_branch
          %1167 = sbr.rel (%p1165) target = $region96
        $region95: #{tpu_custom_call.1} parent=91 // pred_region
          %s1168 = sand.u32 %s255, 1
          %s1169 = scalar_lea.sflag [#allocation5], %s1168
          %s1170 = sand.u32 %s255, 1
          %s1171 = smul.addr %s1170, 8
          %s1172 = scalar_lea.vmem [#allocation12], %s1171
          %1173 = dma.done %s1169, 128
        $region96: #{tpu_custom_call.1} parent=91 // pred_fallthru
          _
      $region92: #{tpu_custom_call.1} parent=5 // pred_fallthru
        _
    $region6: #{tpu_custom_call.1} parent=1 // loop_footer
      %s29 = sadd.s32 1, %s25
    $region7: #{tpu_custom_call.1} parent=1 // loop_footer_branch
      %24 = sbr.rel target = $region3
    $region8: #{tpu_custom_call.1} parent=1 // loop_exit
      _
    %1174 = vsyncpa [#allocation4], 1
    %s1175 = scalar_lea.sflag [#allocation4], 1
    %1176 = vsyncpa %s1175, 1
    %1177 = vsyncpa [#allocation7], 1
    %s1178 = scalar_lea.sflag [#allocation7], 1
    %1179 = vsyncpa %s1178, 1
    %1180 = vsyncpa [#allocation10], 1
    %1181 = vsyncpa [#allocation5], 1
    %s1182 = scalar_lea.sflag [#allocation5], 1
    %1183 = vsyncpa %s1182, 1

</llo_original>
